<compile_context>
chip_gen: v7x
topology: tpu7x:2x2x1
jax: 0.10.0
libtpu: 0.0.40
codegen_flags: <defaults>
</compile_context>

<pallas_src>
import functools
import math

import jax
import jax.numpy as jnp
from jax import lax
from jax.experimental import pallas as pl
from jax.experimental.pallas import tpu as pltpu

_MIB = 1024 * 1024


# ---------------------------------------------------------------------------
# small helpers
# ---------------------------------------------------------------------------
def _nbytes(shape, dtype):
    return math.prod(shape) * jnp.dtype(dtype).itemsize


def _vmem_limit(pipelined_bytes, resident_bytes):
    """Scoped-VMEM request: double-buffered tiles + resident constants/scratch with 2x
    headroom, clamped to [32 MiB, 64 MiB] (64 MiB == v7x physical VMEM; v5e/v6e have
    128 MiB so the cap is always legal)."""
    need = 2 * pipelined_bytes + resident_bytes
    return int(min(64 * _MIB, max(32 * _MIB, 2 * need)))


def _pick_tile(n, preferred=256):
    """Largest tile <= `preferred` that divides n (256-multiples feed the v7x MXU best,
    128 suffices on v5e/v6e); falls back to the full extent."""
    if n <= preferred:
        return n
    for t in (preferred, 128, 64, 32, 16, 8):
        if n % t == 0:
            return t
    return n


def _erf(x):
    # Abramowitz & Stegun 7.1.26 rational approximation; max abs error ~1.5e-7
    # (exact at f32 resolution).  Only uses exp + VPU arithmetic.
    a1, a2, a3, a4, a5 = 0.254829592, -0.284496736, 1.421413741, -1.453152027, 1.061405429
    p = 0.3275911
    sgn = jnp.where(x >= 0.0, 1.0, -1.0)
    z = jnp.abs(x)
    t = 1.0 / (1.0 + p * z)
    poly = ((((a5 * t + a4) * t + a3) * t + a2) * t + a1) * t
    return sgn * (1.0 - poly * jnp.exp(-z * z))


def _gelu_exact(x):  # nn.GELU default (erf form)
    return 0.5 * x * (1.0 + _erf(x * 0.7071067811865476))


def _rms_norm(x, w, eps):
    return x * lax.rsqrt(jnp.mean(x * x, axis=-1, keepdims=True) + eps) * w


# ---------------------------------------------------------------------------
# kernel 1: RMSNorm1 + fused QKV projection
# ---------------------------------------------------------------------------
def _qkv_proj_kernel(x_ref, n1w_ref, wqkv_ref, bqkv_ref, qkv_ref, *, eps):
    f32, bf16 = jnp.float32, jnp.bfloat16
    x = x_ref[...].astype(f32)                                       # (Ts, D)
    nx = _rms_norm(x, n1w_ref[...], eps)                             # RMSNorm 1 (f32)
    qkv = jnp.dot(nx.astype(bf16), wqkv_ref[...],
                  preferred_element_type=f32) + bqkv_ref[...]        # (Ts, 3D)
    qkv_ref[...] = qkv.astype(qkv_ref.dtype)


# ---------------------------------------------------------------------------
# kernel 2: flash attention (online softmax) + out-proj + residual + RMSNorm2 + FFN
# ---------------------------------------------------------------------------
def _attn_ffn_kernel(
    q_ref, k_ref, v_ref, bias_ref, cos_ref, sin_ref, x_ref,
    wout_ref, bout_ref, n2w_ref, w1_ref, b1_ref, w2_ref, b2_ref,
    out_ref, m_s, l_s, acc_s,
    *, dim_head, eps, use_roll,
):
    f32, bf16 = jnp.float32, jnp.bfloat16
    hd2 = dim_head // 2
    scale = dim_head ** (-0.5)
    ki = pl.program_id(2)

    @pl.when(ki == 0)
    def _():
        m_s[...] = jnp.full_like(m_s, -1e30)
        l_s[...] = jnp.zeros_like(l_s)
        acc_s[...] = jnp.zeros_like(acc_s)

    cos2 = cos_ref[...]                                              # (H, 1, Dh) = [c,  c]
    sin2 = sin_ref[...]                                              # (H, 1, Dh) = [-s, s]

    def rope(t):                                                     # (H, T, Dh) f32
        if use_roll:
            # lane-aligned Dh: rotate-half via the XLU, no slicing / concat
            return t * cos2 + pltpu.roll(t, hd2, axis=-1) * sin2
        r, i = t[..., :hd2], t[..., hd2:]
        return jnp.concatenate(
            [r * cos2[..., :hd2] + i * sin2[..., :hd2],              # r*c - i*s
             i * cos2[..., hd2:] + r * sin2[..., hd2:]], axis=-1)    # i*c + r*s

    # rotary angles indexed by HEAD (bug-faithful); 1/sqrt(Dh) folded into q
    qr = (rope(q_ref[...].astype(f32)) * scale).astype(bf16)         # (H, Tq, Dh)
    kr = rope(k_ref[...].astype(f32)).astype(bf16)                   # (H, Tk, Dh)

    # ---- one KV tile of the online-softmax attention (head-batched MXU dots) ----
    s = jnp.einsum("hqd,hkd->hqk", qr, kr,
                   preferred_element_type=f32) + bias_ref[...]       # (H, Tq, Tk)
    m_prev = m_s[...]
    m_new = jnp.maximum(m_prev, jnp.max(s, axis=-1, keepdims=True))
    alpha = jnp.exp(m_prev - m_new)
    p = jnp.exp(s - m_new)
    l_s[...] = alpha * l_s[...] + jnp.sum(p, axis=-1, keepdims=True)
    acc_s[...] = alpha * acc_s[...] + jnp.einsum(
        "hqk,hkd->hqd", p.astype(bf16), v_ref[...], preferred_element_type=f32)
    m_s[...] = m_new
    # dropout on attention probabilities: identity (inference)

    @pl.when(ki == pl.num_programs(2) - 1)
    def _():
        o = acc_s[...] * pl.reciprocal(l_s[...], approx=True)        # (H, Tq, Dh)
        # head merge folded into the output projection (batched dot + major-dim sum)
        attn = jnp.sum(
            jnp.einsum("hqd,hde->hqe", o.astype(bf16), wout_ref[...],
                       preferred_element_type=f32), axis=0) + bout_ref[...]
        x1 = x_ref[...].astype(f32) + attn                           # residual (dropout1: id)
        nx2 = _rms_norm(x1, n2w_ref[...], eps)                       # RMSNorm 2
        h1 = jnp.dot(nx2.astype(bf16), w1_ref[...],
                     preferred_element_type=f32) + b1_ref[...]
        h1 = _gelu_exact(h1)                                         # nn.GELU default (erf)
        ff = jnp.dot(h1.astype(bf16), w2_ref[...],
                     preferred_element_type=f32) + b2_ref[...]
        out_ref[...] = (x1 + ff).astype(out_ref.dtype)               # residual (dropout2: id)


# ---------------------------------------------------------------------------
# wrapper
# ---------------------------------------------------------------------------
@functools.partial(jax.jit, static_argnames=("num_heads", "dim_head", "eps"))
def transformer_layer(x, cos, sin, mask, params, *, num_heads, dim_head, eps=1e-6):
    B, S, D = x.shape
    H, Dh = num_heads, dim_head
    F = params["w1"].shape[-1]
    f32, bf16 = jnp.float32, jnp.bfloat16

    # ---- wrapper-side layout / constant prep (XLA layout plumbing, not compute) ----
    wqkv = params["wqkv"].astype(bf16)                               # (D, 3D)
    wout_h = params["wout"].astype(bf16).reshape(H, Dh, D)           # (H, Dh, D)
    w1 = params["w1"].astype(bf16)
    w2 = params["w2"].astype(bf16)
    # additive mask bias precomputed (no (S,S) vmul in the kernel); -1e30 (not -inf) so
    # fully-masked rows give a uniform distribution instead of NaN.
    bias = jnp.where(mask > 0.5, jnp.float32(-1e30), jnp.float32(0.0))
    # full-width rotary constants: cos2 = [c, c], sin2 = [-s, s]   (head-indexed angles)
    cos2 = jnp.concatenate([cos, cos], axis=-1).reshape(H, 1, Dh).astype(f32)
    sin2 = jnp.concatenate([-sin, sin], axis=-1).reshape(H, 1, Dh).astype(f32)

    # ---------------- kernel 1: RMSNorm1 + fused QKV projection ----------------
    Ts = _pick_tile(S)
    nS = S // Ts
    k1_pipe = _nbytes((Ts, D), f32) + _nbytes((Ts, 3 * D), bf16)
    k1_res = (_nbytes((D, 3 * D), bf16) + _nbytes((1, 3 * D), f32) + _nbytes((1, D), f32))
    qkv = pl.pallas_call(
        functools.partial(_qkv_proj_kernel, eps=eps),
        grid=(B, nS),
        in_specs=[
            pl.BlockSpec((pl.Squeezed(), Ts, D), lambda b, i: (b, i, 0)),
            pl.BlockSpec((1, D), lambda b, i: (0, 0)),
            pl.BlockSpec((D, 3 * D), lambda b, i: (0, 0)),
            pl.BlockSpec((1, 3 * D), lambda b, i: (0, 0)),
        ],
        out_specs=pl.BlockSpec((pl.Squeezed(), Ts, 3 * D), lambda b, i: (b, i, 0)),
        out_shape=jax.ShapeDtypeStruct((B, S, 3 * D), bf16),
        compiler_params=pltpu.CompilerParams(
            dimension_semantics=("parallel", "parallel"),
            vmem_limit_bytes=_vmem_limit(k1_pipe, k1_res)),
    )(x, params["n1w"], wqkv, params["bqkv"])

    # head split in XLA: (B, S, 3, H, Dh) -> 3 x (B, H, S, Dh)
    qkv = qkv.reshape(B, S, 3, H, Dh)
    q = qkv[:, :, 0].transpose(0, 2, 1, 3)
    k = qkv[:, :, 1].transpose(0, 2, 1, 3)
    v = qkv[:, :, 2].transpose(0, 2, 1, 3)

    # ---------------- kernel 2: flash attention + fused epilogue ----------------
    Tq = _pick_tile(S)
    Tk = _pick_tile(S)
    nQ, nK = S // Tq, S // Tk
    use_roll = (Dh % 128 == 0)   # lane-aligned rotate-half; slice+concat otherwise

    k2_pipe = (_nbytes((H, Tq, Dh), bf16) + 2 * _nbytes((H, Tk, Dh), bf16)
               + _nbytes((Tq, Tk), f32) + 2 * _nbytes((Tq, D), f32))
    k2_res = (_nbytes((H, Dh, D), bf16) + _nbytes((D, F), bf16) + _nbytes((F, D), bf16)
              + 2 * _nbytes((H, 1, Dh), f32) + _nbytes((H, Tq, Dh + 2), f32)
              + 4 * _nbytes((1, max(D, F)), f32))

    out = pl.pallas_call(
        functools.partial(_attn_ffn_kernel, dim_head=Dh, eps=eps, use_roll=use_roll),
        grid=(B, nQ, nK),
        in_specs=[
            pl.BlockSpec((pl.Squeezed(), H, Tq, Dh), lambda b, qi, ki: (b, 0, qi, 0)),  # q
            pl.BlockSpec((pl.Squeezed(), H, Tk, Dh), lambda b, qi, ki: (b, 0, ki, 0)),  # k
            pl.BlockSpec((pl.Squeezed(), H, Tk, Dh), lambda b, qi, ki: (b, 0, ki, 0)),  # v
            pl.BlockSpec((Tq, Tk), lambda b, qi, ki: (qi, ki)),                          # bias
            pl.BlockSpec((H, 1, Dh), lambda b, qi, ki: (0, 0, 0)),                       # cos2
            pl.BlockSpec((H, 1, Dh), lambda b, qi, ki: (0, 0, 0)),                       # sin2
            pl.BlockSpec((pl.Squeezed(), Tq, D), lambda b, qi, ki: (b, qi, 0)),          # x
            pl.BlockSpec((H, Dh, D), lambda b, qi, ki: (0, 0, 0)),                       # wout
            pl.BlockSpec((1, D), lambda b, qi, ki: (0, 0)),                              # bout
            pl.BlockSpec((1, D), lambda b, qi, ki: (0, 0)),                              # n2w
            pl.BlockSpec((D, F), lambda b, qi, ki: (0, 0)),                              # w1
            pl.BlockSpec((1, F), lambda b, qi, ki: (0, 0)),                              # b1
            pl.BlockSpec((F, D), lambda b, qi, ki: (0, 0)),                              # w2
            pl.BlockSpec((1, D), lambda b, qi, ki: (0, 0)),                              # b2
        ],
        out_specs=pl.BlockSpec((pl.Squeezed(), Tq, D), lambda b, qi, ki: (b, qi, 0)),
        out_shape=jax.ShapeDtypeStruct((B, S, D), x.dtype),
        scratch_shapes=[
            pltpu.VMEM((H, Tq, 1), jnp.float32),    # running max
            pltpu.VMEM((H, Tq, 1), jnp.float32),    # running sum
            pltpu.VMEM((H, Tq, Dh), jnp.float32),   # un-normalized output accumulator
        ],
        compiler_params=pltpu.CompilerParams(
            dimension_semantics=("parallel", "parallel", "arbitrary"),
            vmem_limit_bytes=_vmem_limit(k2_pipe, k2_res)),
    )(q, k, v, bias, cos2, sin2, x, wout_h, params["bout"], params["n2w"],
      w1, params["b1"], w2, params["b2"])
    return out


# ---------------------------------------------------------------------------
# pure-JAX f32 reference mirroring the PyTorch forward (inference / no dropout)
# ---------------------------------------------------------------------------
def reference_layer(x, cos, sin, mask, params, *, num_heads, dim_head, eps=1e-6):
    B, S, D = x.shape
    hd2 = dim_head // 2
    scale = dim_head ** (-0.5)
    hp = dict(precision="highest")

    def rms(t, w):
        return t * jax.lax.rsqrt(jnp.mean(t * t, -1, keepdims=True) + eps) * w[0]

    nx = rms(x, params["n1w"])
    qkv = jnp.einsum("bsd,de->bse", nx, params["wqkv"], **hp) + params["bqkv"][0]
    q, k, v = jnp.split(qkv, 3, axis=-1)

    def heads(t):  # (B,S,D) -> (B,H,S,Dh)
        return t.reshape(B, S, num_heads, dim_head).transpose(0, 2, 1, 3)

    q, k, v = heads(q), heads(k), heads(v)

    def rope(t):  # angles indexed by HEAD (bug-faithful)
        c = cos[None, :, None, :]
        s = sin[None, :, None, :]
        r, i = t[..., :hd2], t[..., hd2:]
        return jnp.concatenate([r * c - i * s, r * s + i * c], axis=-1)

    qr, kr = rope(q), rope(k)
    sc = jnp.einsum("bhqd,bhkd->bhqk", qr, kr, **hp) * scale
    sc = jnp.where(mask[None, None] > 0.5, -jnp.inf, sc)
    p = jax.nn.softmax(sc, axis=-1)
    o = jnp.einsum("bhqk,bhkd->bhqd", p, v, **hp)
    o = o.transpose(0, 2, 1, 3).reshape(B, S, D)
    attn = jnp.einsum("bsd,de->bse", o, params["wout"], **hp) + params["bout"][0]
    x1 = x + attn
    nx2 = rms(x1, params["n2w"])
    h1 = jax.nn.gelu(
        jnp.einsum("bsd,df->bsf", nx2, params["w1"], **hp) + params["b1"][0],
        approximate=False)
    ff = jnp.einsum("bsf,fd->bsd", h1, params["w2"], **hp) + params["b2"][0]
    return x1 + ff


if __name__ == "__main__":
    # small config consistent with the module
    B, S = 2, 8
    dim_model, num_heads, dim_ff = 32, 4, 32
    dim_head = dim_model // num_heads
    hd2 = dim_head // 2
    max_len = 16

    key = jax.random.PRNGKey(0)
    ks = jax.random.split(key, 12)
    sc = 0.1

    params = {
        "n1w": jnp.ones((1, dim_model), jnp.float32),
        "n2w": jnp.ones((1, dim_model), jnp.float32),
        # Linear weights stored as (in, out) == torch_weight.T
        "wqkv": sc * jax.random.normal(ks[0], (dim_model, 3 * dim_model), jnp.float32),
        "bqkv": sc * jax.random.normal(ks[1], (1, 3 * dim_model), jnp.float32),
        "wout": sc * jax.random.normal(ks[2], (dim_model, dim_model), jnp.float32),
        "bout": sc * jax.random.normal(ks[3], (1, dim_model), jnp.float32),
        "w1": sc * jax.random.normal(ks[4], (dim_model, dim_ff), jnp.float32),
        "b1": sc * jax.random.normal(ks[5], (1, dim_ff), jnp.float32),
        "w2": sc * jax.random.normal(ks[6], (dim_ff, dim_model), jnp.float32),
        "b2": sc * jax.random.normal(ks[7], (1, dim_model), jnp.float32),
    }

    x = jax.random.normal(ks[8], (B, S, dim_model), jnp.float32)

    # freqs_cis = cos + i*sin of shape (1, max_len, dim_head//2); the reference
    # apply_rotary_emb ends up slicing the first `num_heads` rows (head-indexed angles).
    inv_freq = 1.0 / (10000.0 ** (jnp.arange(0, hd2, dtype=jnp.float32) * 2.0 / dim_head))
    angles = jnp.arange(max_len, dtype=jnp.float32)[:, None] * inv_freq[None, :]
    cos = jnp.cos(angles)[:num_heads, :]                     # (H, hd2)
    sin = jnp.sin(angles)[:num_heads, :]

    # causal mask: 1.0 where attention is disallowed
    mask = (jnp.arange(S)[None, :] > jnp.arange(S)[:, None]).astype(jnp.float32)

    out = transformer_layer(x, cos, sin, mask, params,
                            num_heads=num_heads, dim_head=dim_head, eps=1e-6)
    out = jax.block_until_ready(out)

    ref = reference_layer(x, cos, sin, mask, params,
                          num_heads=num_heads, dim_head=dim_head, eps=1e-6)
    assert out.shape == (B, S, dim_model)
    assert bool(jnp.all(jnp.isfinite(out)))
    # bf16 MXU operands / bf16 q,k,v intermediate (f32 accumulation) vs an all-f32 reference.
    assert bool(jnp.allclose(out, ref, atol=2e-2, rtol=2e-2))

    print("KERNEL_OK")
</pallas_src>

<mosaic_0001>
module attributes {stable_mosaic.version = 11 : i64} {
  func.func @_qkv_proj_kernel(%arg0: i32, %arg1: i32, %arg2: memref<1x8x32xf32, #tpu.memory_space<vmem>>, %arg3: memref<1x32xf32, #tpu.memory_space<vmem>>, %arg4: memref<32x96xbf16, #tpu.memory_space<vmem>>, %arg5: memref<1x96xf32, #tpu.memory_space<vmem>>, %arg6: memref<1x8x96xbf16, #tpu.memory_space<vmem>>) attributes {dimension_semantics = [#tpu.dimension_semantics<parallel>, #tpu.dimension_semantics<parallel>], iteration_bounds = array<i64: 2, 1>, scalar_prefetch = 0 : i64, scratch_operands = 0 : i64, tpu.core_type = #tpu.core_type<tc>, window_params = [{transform_indices = @transform_0, window_bounds = array<i64: 1, 8, 32>}, {pipeline_mode = #tpu.pipeline_mode<synchronous>, transform_indices = @transform_1, window_bounds = array<i64: 1, 32>}, {pipeline_mode = #tpu.pipeline_mode<synchronous>, transform_indices = @transform_2, window_bounds = array<i64: 32, 96>}, {pipeline_mode = #tpu.pipeline_mode<synchronous>, transform_indices = @transform_3, window_bounds = array<i64: 1, 96>}, {transform_indices = @transform_4, window_bounds = array<i64: 1, 8, 96>}]} {
    %c0 = arith.constant 0 : index
    %c0_0 = arith.constant 0 : index
    %c0_1 = arith.constant 0 : index
    %0 = vector.load %arg2[%c0, %c0_0, %c0_1] : memref<1x8x32xf32, #tpu.memory_space<vmem>>, vector<1x8x32xf32>
    %1 = vector.shape_cast %0 : vector<1x8x32xf32> to vector<8x32xf32>
    %c0_2 = arith.constant 0 : index
    %c0_3 = arith.constant 0 : index
    %2 = vector.load %arg3[%c0_2, %c0_3] : memref<1x32xf32, #tpu.memory_space<vmem>>, vector<1x32xf32>
    %3 = arith.mulf %1, %1 : vector<8x32xf32>
    %cst = arith.constant dense<0.000000e+00> : vector<8xf32>
    %4 = vector.multi_reduction <add>, %3, %cst [1] : vector<8x32xf32> to vector<8xf32>
    %5 = vector.shape_cast %4 : vector<8xf32> to vector<8x1xf32>
    %cst_4 = arith.constant 3.200000e+01 : f32
    %6 = vector.broadcast %cst_4 : f32 to vector<8x1xf32>
    %7 = arith.divf %5, %6 : vector<8x1xf32>
    %cst_5 = arith.constant 9.99999997E-7 : f32
    %8 = vector.broadcast %cst_5 : f32 to vector<8x1xf32>
    %9 = arith.addf %7, %8 : vector<8x1xf32>
    %10 = math.rsqrt %9 : vector<8x1xf32>
    %11 = vector.broadcast %10 : vector<8x1xf32> to vector<8x32xf32>
    %12 = arith.mulf %1, %11 : vector<8x32xf32>
    %13 = vector.broadcast %2 : vector<1x32xf32> to vector<8x32xf32>
    %14 = arith.mulf %12, %13 : vector<8x32xf32>
    %15 = arith.truncf %14 : vector<8x32xf32> to vector<8x32xbf16>
    %c0_6 = arith.constant 0 : index
    %c0_7 = arith.constant 0 : index
    %16 = vector.load %arg4[%c0_6, %c0_7] : memref<32x96xbf16, #tpu.memory_space<vmem>>, vector<32x96xbf16>
    %cst_8 = arith.constant dense<0.000000e+00> : vector<8x96xf32>
    %17 = tpu.matmul %15, %16, %cst_8 {dimension_numbers = #tpu.dot_dimension_numbers<[1], [0], [0], [1], [0, 0, 1, 1], [], []>} : vector<8x32xbf16>, vector<32x96xbf16>, vector<8x96xf32> -> vector<8x96xf32>
    %c0_9 = arith.constant 0 : index
    %c0_10 = arith.constant 0 : index
    %18 = vector.load %arg5[%c0_9, %c0_10] : memref<1x96xf32, #tpu.memory_space<vmem>>, vector<1x96xf32>
    %19 = vector.broadcast %18 : vector<1x96xf32> to vector<8x96xf32>
    %20 = arith.addf %17, %19 : vector<8x96xf32>
    %21 = arith.truncf %20 : vector<8x96xf32> to vector<8x96xbf16>
    %c0_11 = arith.constant 0 : index
    %c0_12 = arith.constant 0 : index
    %c0_13 = arith.constant 0 : index
    %22 = vector.load %arg6[%c0_11, %c0_12, %c0_13] : memref<1x8x96xbf16, #tpu.memory_space<vmem>>, vector<1x8x96xbf16>
    %23 = vector.shape_cast %22 : vector<1x8x96xbf16> to vector<8x96xbf16>
    %24 = vector.shape_cast %21 : vector<8x96xbf16> to vector<1x8x96xbf16>
    tpu.vector_store %arg6[%c0_11, %c0_12, %c0_13], %24 {strides = array<i32>} : memref<1x8x96xbf16, #tpu.memory_space<vmem>>, vector<1x8x96xbf16>,
    return
  }
  func.func @transform_0(%arg0: i32, %arg1: i32) -> (i32, i32, i32) {
    %c0_i32 = arith.constant 0 : i32
    %c0_i32_0 = arith.constant 0 : i32
    return %arg0, %arg1, %c0_i32 : i32, i32, i32
  }
  func.func @transform_1(%arg0: i32, %arg1: i32) -> (i32, i32) {
    %c0_i32 = arith.constant 0 : i32
    %c0_i32_0 = arith.constant 0 : i32
    %c0_i32_1 = arith.constant 0 : i32
    return %c0_i32, %c0_i32_0 : i32, i32
  }
  func.func @transform_2(%arg0: i32, %arg1: i32) -> (i32, i32) {
    %c0_i32 = arith.constant 0 : i32
    %c0_i32_0 = arith.constant 0 : i32
    %c0_i32_1 = arith.constant 0 : i32
    return %c0_i32, %c0_i32_0 : i32, i32
  }
  func.func @transform_3(%arg0: i32, %arg1: i32) -> (i32, i32) {
    %c0_i32 = arith.constant 0 : i32
    %c0_i32_0 = arith.constant 0 : i32
    %c0_i32_1 = arith.constant 0 : i32
    return %c0_i32, %c0_i32_0 : i32, i32
  }
  func.func @transform_4(%arg0: i32, %arg1: i32) -> (i32, i32, i32) {
    %c0_i32 = arith.constant 0 : i32
    %c0_i32_0 = arith.constant 0 : i32
    return %arg0, %arg1, %c0_i32 : i32, i32, i32
  }
}

module attributes {stable_mosaic.version = 11 : i64} {
  func.func @_attn_ffn_kernel(%arg0: i32, %arg1: i32, %arg2: i32, %arg3: memref<1x4x8x8xbf16, #tpu.memory_space<vmem>>, %arg4: memref<1x4x8x8xbf16, #tpu.memory_space<vmem>>, %arg5: memref<1x4x8x8xbf16, #tpu.memory_space<vmem>>, %arg6: memref<8x8xf32, #tpu.memory_space<vmem>>, %arg7: memref<4x1x8xf32, #tpu.memory_space<vmem>>, %arg8: memref<4x1x8xf32, #tpu.memory_space<vmem>>, %arg9: memref<1x8x32xf32, #tpu.memory_space<vmem>>, %arg10: memref<4x8x32xbf16, #tpu.memory_space<vmem>>, %arg11: memref<1x32xf32, #tpu.memory_space<vmem>>, %arg12: memref<1x32xf32, #tpu.memory_space<vmem>>, %arg13: memref<32x32xbf16, #tpu.memory_space<vmem>>, %arg14: memref<1x32xf32, #tpu.memory_space<vmem>>, %arg15: memref<32x32xbf16, #tpu.memory_space<vmem>>, %arg16: memref<1x32xf32, #tpu.memory_space<vmem>>, %arg17: memref<1x8x32xf32, #tpu.memory_space<vmem>>, %arg18: memref<4x8x1xf32, #tpu.memory_space<vmem>>, %arg19: memref<4x8x1xf32, #tpu.memory_space<vmem>>, %arg20: memref<4x8x8xf32, #tpu.memory_space<vmem>>) attributes {dimension_semantics = [#tpu.dimension_semantics<parallel>, #tpu.dimension_semantics<parallel>, #tpu.dimension_semantics<arbitrary>], iteration_bounds = array<i64: 2, 1, 1>, scalar_prefetch = 0 : i64, scratch_operands = 3 : i64, tpu.core_type = #tpu.core_type<tc>, window_params = [{transform_indices = @transform_0, window_bounds = array<i64: 1, 4, 8, 8>}, {transform_indices = @transform_1, window_bounds = array<i64: 1, 4, 8, 8>}, {transform_indices = @transform_2, window_bounds = array<i64: 1, 4, 8, 8>}, {transform_indices = @transform_3, window_bounds = array<i64: 8, 8>}, {pipeline_mode = #tpu.pipeline_mode<synchronous>, transform_indices = @transform_4, window_bounds = array<i64: 4, 1, 8>}, {pipeline_mode = #tpu.pipeline_mode<synchronous>, transform_indices = @transform_5, window_bounds = array<i64: 4, 1, 8>}, {transform_indices = @transform_6, window_bounds = array<i64: 1, 8, 32>}, {pipeline_mode = #tpu.pipeline_mode<synchronous>, transform_indices = @transform_7, window_bounds = array<i64: 4, 8, 32>}, {pipeline_mode = #tpu.pipeline_mode<synchronous>, transform_indices = @transform_8, window_bounds = array<i64: 1, 32>}, {pipeline_mode = #tpu.pipeline_mode<synchronous>, transform_indices = @transform_9, window_bounds = array<i64: 1, 32>}, {pipeline_mode = #tpu.pipeline_mode<synchronous>, transform_indices = @transform_10, window_bounds = array<i64: 32, 32>}, {pipeline_mode = #tpu.pipeline_mode<synchronous>, transform_indices = @transform_11, window_bounds = array<i64: 1, 32>}, {pipeline_mode = #tpu.pipeline_mode<synchronous>, transform_indices = @transform_12, window_bounds = array<i64: 32, 32>}, {pipeline_mode = #tpu.pipeline_mode<synchronous>, transform_indices = @transform_13, window_bounds = array<i64: 1, 32>}, {transform_indices = @transform_14, window_bounds = array<i64: 1, 8, 32>}]} {
    %c0_i32 = arith.constant 0 : i32
    %0 = arith.cmpi eq, %arg2, %c0_i32 : i32
    %1 = arith.extui %0 : i1 to i32
    %c0_i32_0 = arith.constant 0 : i32
    %2 = arith.cmpi ne, %1, %c0_i32_0 : i32
    scf.if %2 {
      %cst_44 = arith.constant -1.000000e+30 : f32
      %82 = vector.broadcast %cst_44 : f32 to vector<4x8x1xf32>
      %c0_45 = arith.constant 0 : index
      %c0_46 = arith.constant 0 : index
      %c0_47 = arith.constant 0 : index
      %83 = vector.load %arg18[%c0_45, %c0_46, %c0_47] : memref<4x8x1xf32, #tpu.memory_space<vmem>>, vector<4x8x1xf32>
      tpu.vector_store %arg18[%c0_45, %c0_46, %c0_47], %82 {strides = array<i32>} : memref<4x8x1xf32, #tpu.memory_space<vmem>>, vector<4x8x1xf32>,
      %cst_48 = arith.constant 0.000000e+00 : f32
      %84 = vector.broadcast %cst_48 : f32 to vector<4x8x1xf32>
      %c0_49 = arith.constant 0 : index
      %c0_50 = arith.constant 0 : index
      %c0_51 = arith.constant 0 : index
      %85 = vector.load %arg19[%c0_49, %c0_50, %c0_51] : memref<4x8x1xf32, #tpu.memory_space<vmem>>, vector<4x8x1xf32>
      tpu.vector_store %arg19[%c0_49, %c0_50, %c0_51], %84 {strides = array<i32>} : memref<4x8x1xf32, #tpu.memory_space<vmem>>, vector<4x8x1xf32>,
      %cst_52 = arith.constant 0.000000e+00 : f32
      %86 = vector.broadcast %cst_52 : f32 to vector<4x8x8xf32>
      %c0_53 = arith.constant 0 : index
      %c0_54 = arith.constant 0 : index
      %c0_55 = arith.constant 0 : index
      %87 = vector.load %arg20[%c0_53, %c0_54, %c0_55] : memref<4x8x8xf32, #tpu.memory_space<vmem>>, vector<4x8x8xf32>
      tpu.vector_store %arg20[%c0_53, %c0_54, %c0_55], %86 {strides = array<i32>} : memref<4x8x8xf32, #tpu.memory_space<vmem>>, vector<4x8x8xf32>,
    } else {
    }
    %c0 = arith.constant 0 : index
    %c0_1 = arith.constant 0 : index
    %c0_2 = arith.constant 0 : index
    %3 = vector.load %arg7[%c0, %c0_1, %c0_2] : memref<4x1x8xf32, #tpu.memory_space<vmem>>, vector<4x1x8xf32>
    %c0_3 = arith.constant 0 : index
    %c0_4 = arith.constant 0 : index
    %c0_5 = arith.constant 0 : index
    %4 = vector.load %arg8[%c0_3, %c0_4, %c0_5] : memref<4x1x8xf32, #tpu.memory_space<vmem>>, vector<4x1x8xf32>
    %c0_6 = arith.constant 0 : index
    %c0_7 = arith.constant 0 : index
    %c0_8 = arith.constant 0 : index
    %c0_9 = arith.constant 0 : index
    %5 = vector.load %arg3[%c0_6, %c0_7, %c0_8, %c0_9] : memref<1x4x8x8xbf16, #tpu.memory_space<vmem>>, vector<1x4x8x8xbf16>
    %6 = vector.shape_cast %5 : vector<1x4x8x8xbf16> to vector<4x8x8xbf16>
    %7 = arith.extf %6 : vector<4x8x8xbf16> to vector<4x8x8xf32>
    %8 = vector.extract_strided_slice %7 {offsets = [0, 0, 0], sizes = [4, 8, 4], strides = [1, 1, 1]} : vector<4x8x8xf32> to vector<4x8x4xf32>
    %9 = vector.extract_strided_slice %7 {offsets = [0, 0, 4], sizes = [4, 8, 4], strides = [1, 1, 1]} : vector<4x8x8xf32> to vector<4x8x4xf32>
    %10 = vector.extract_strided_slice %3 {offsets = [0, 0, 0], sizes = [4, 1, 4], strides = [1, 1, 1]} : vector<4x1x8xf32> to vector<4x1x4xf32>
    %11 = vector.broadcast %10 : vector<4x1x4xf32> to vector<4x8x4xf32>
    %12 = arith.mulf %8, %11 : vector<4x8x4xf32>
    %13 = vector.extract_strided_slice %4 {offsets = [0, 0, 0], sizes = [4, 1, 4], strides = [1, 1, 1]} : vector<4x1x8xf32> to vector<4x1x4xf32>
    %14 = vector.broadcast %13 : vector<4x1x4xf32> to vector<4x8x4xf32>
    %15 = arith.mulf %9, %14 : vector<4x8x4xf32>
    %16 = arith.addf %12, %15 : vector<4x8x4xf32>
    %17 = vector.extract_strided_slice %3 {offsets = [0, 0, 4], sizes = [4, 1, 4], strides = [1, 1, 1]} : vector<4x1x8xf32> to vector<4x1x4xf32>
    %18 = vector.broadcast %17 : vector<4x1x4xf32> to vector<4x8x4xf32>
    %19 = arith.mulf %9, %18 : vector<4x8x4xf32>
    %20 = vector.extract_strided_slice %4 {offsets = [0, 0, 4], sizes = [4, 1, 4], strides = [1, 1, 1]} : vector<4x1x8xf32> to vector<4x1x4xf32>
    %21 = vector.broadcast %20 : vector<4x1x4xf32> to vector<4x8x4xf32>
    %22 = arith.mulf %8, %21 : vector<4x8x4xf32>
    %23 = arith.addf %19, %22 : vector<4x8x4xf32>
    %24 = tpu.concatenate %16, %23 in 2 : vector<4x8x4xf32>, vector<4x8x4xf32> -> vector<4x8x8xf32>
    %cst = arith.constant 0.353553385 : f32
    %25 = vector.broadcast %cst : f32 to vector<4x8x8xf32>
    %26 = arith.mulf %24, %25 : vector<4x8x8xf32>
    %27 = arith.truncf %26 : vector<4x8x8xf32> to vector<4x8x8xbf16>
    %c0_10 = arith.constant 0 : index
    %c0_11 = arith.constant 0 : index
    %c0_12 = arith.constant 0 : index
    %c0_13 = arith.constant 0 : index
    %28 = vector.load %arg4[%c0_10, %c0_11, %c0_12, %c0_13] : memref<1x4x8x8xbf16, #tpu.memory_space<vmem>>, vector<1x4x8x8xbf16>
    %29 = vector.shape_cast %28 : vector<1x4x8x8xbf16> to vector<4x8x8xbf16>
    %30 = arith.extf %29 : vector<4x8x8xbf16> to vector<4x8x8xf32>
    %31 = vector.extract_strided_slice %30 {offsets = [0, 0, 0], sizes = [4, 8, 4], strides = [1, 1, 1]} : vector<4x8x8xf32> to vector<4x8x4xf32>
    %32 = vector.extract_strided_slice %30 {offsets = [0, 0, 4], sizes = [4, 8, 4], strides = [1, 1, 1]} : vector<4x8x8xf32> to vector<4x8x4xf32>
    %33 = vector.extract_strided_slice %3 {offsets = [0, 0, 0], sizes = [4, 1, 4], strides = [1, 1, 1]} : vector<4x1x8xf32> to vector<4x1x4xf32>
    %34 = vector.broadcast %33 : vector<4x1x4xf32> to vector<4x8x4xf32>
    %35 = arith.mulf %31, %34 : vector<4x8x4xf32>
    %36 = vector.extract_strided_slice %4 {offsets = [0, 0, 0], sizes = [4, 1, 4], strides = [1, 1, 1]} : vector<4x1x8xf32> to vector<4x1x4xf32>
    %37 = vector.broadcast %36 : vector<4x1x4xf32> to vector<4x8x4xf32>
    %38 = arith.mulf %32, %37 : vector<4x8x4xf32>
    %39 = arith.addf %35, %38 : vector<4x8x4xf32>
    %40 = vector.extract_strided_slice %3 {offsets = [0, 0, 4], sizes = [4, 1, 4], strides = [1, 1, 1]} : vector<4x1x8xf32> to vector<4x1x4xf32>
    %41 = vector.broadcast %40 : vector<4x1x4xf32> to vector<4x8x4xf32>
    %42 = arith.mulf %32, %41 : vector<4x8x4xf32>
    %43 = vector.extract_strided_slice %4 {offsets = [0, 0, 4], sizes = [4, 1, 4], strides = [1, 1, 1]} : vector<4x1x8xf32> to vector<4x1x4xf32>
    %44 = vector.broadcast %43 : vector<4x1x4xf32> to vector<4x8x4xf32>
    %45 = arith.mulf %31, %44 : vector<4x8x4xf32>
    %46 = arith.addf %42, %45 : vector<4x8x4xf32>
    %47 = tpu.concatenate %39, %46 in 2 : vector<4x8x4xf32>, vector<4x8x4xf32> -> vector<4x8x8xf32>
    %48 = arith.truncf %47 : vector<4x8x8xf32> to vector<4x8x8xbf16>
    "tpu.trace_start"() <{level = 10 : i32, message = "hqd,hkd->hqk"}> : () -> ()
    %cst_14 = arith.constant dense<0.000000e+00> : vector<4x8x8xf32>
    %49 = tpu.matmul %27, %48, %cst_14 {dimension_numbers = #tpu.dot_dimension_numbers<[2], [2], [1], [1], [0, 0, 0, 1, 1, 1], [0], [0]>} : vector<4x8x8xbf16>, vector<4x8x8xbf16>, vector<4x8x8xf32> -> vector<4x8x8xf32>
    "tpu.trace_stop"() : () -> ()
    %c0_15 = arith.constant 0 : index
    %c0_16 = arith.constant 0 : index
    %50 = vector.load %arg6[%c0_15, %c0_16] : memref<8x8xf32, #tpu.memory_space<vmem>>, vector<8x8xf32>
    %51 = vector.shape_cast %50 : vector<8x8xf32> to vector<1x8x8xf32>
    %52 = vector.broadcast %51 : vector<1x8x8xf32> to vector<4x8x8xf32>
    %53 = arith.addf %49, %52 : vector<4x8x8xf32>
    %c0_17 = arith.constant 0 : index
    %c0_18 = arith.constant 0 : index
    %c0_19 = arith.constant 0 : index
    %54 = vector.load %arg18[%c0_17, %c0_18, %c0_19] : memref<4x8x1xf32, #tpu.memory_space<vmem>>, vector<4x8x1xf32>
    %cst_20 = arith.constant dense<0xFF800000> : vector<4x8xf32>
    %55 = vector.multi_reduction <maximumf>, %53, %cst_20 [2] : vector<4x8x8xf32> to vector<4x8xf32>
    %56 = vector.shape_cast %55 : vector<4x8xf32> to vector<4x8x1xf32>
    %57 = arith.maximumf %54, %56 : vector<4x8x1xf32>
    %58 = arith.subf %54, %57 : vector<4x8x1xf32>
    %59 = math.exp %58 : vector<4x8x1xf32>
    %60 = vector.broadcast %57 : vector<4x8x1xf32> to vector<4x8x8xf32>
    %61 = arith.subf %53, %60 : vector<4x8x8xf32>
    %62 = math.exp %61 : vector<4x8x8xf32>
    %c0_21 = arith.constant 0 : index
    %c0_22 = arith.constant 0 : index
    %c0_23 = arith.constant 0 : index
    %63 = vector.load %arg19[%c0_21, %c0_22, %c0_23] : memref<4x8x1xf32, #tpu.memory_space<vmem>>, vector<4x8x1xf32>
    %64 = arith.mulf %59, %63 : vector<4x8x1xf32>
    %cst_24 = arith.constant dense<0.000000e+00> : vector<4x8xf32>
    %65 = vector.multi_reduction <add>, %62, %cst_24 [2] : vector<4x8x8xf32> to vector<4x8xf32>
    %66 = vector.shape_cast %65 : vector<4x8xf32> to vector<4x8x1xf32>
    %67 = arith.addf %64, %66 : vector<4x8x1xf32>
    %c0_25 = arith.constant 0 : index
    %c0_26 = arith.constant 0 : index
    %c0_27 = arith.constant 0 : index
    %68 = vector.load %arg19[%c0_25, %c0_26, %c0_27] : memref<4x8x1xf32, #tpu.memory_space<vmem>>, vector<4x8x1xf32>
    tpu.vector_store %arg19[%c0_25, %c0_26, %c0_27], %67 {strides = array<i32>} : memref<4x8x1xf32, #tpu.memory_space<vmem>>, vector<4x8x1xf32>,
    %c0_28 = arith.constant 0 : index
    %c0_29 = arith.constant 0 : index
    %c0_30 = arith.constant 0 : index
    %69 = vector.load %arg20[%c0_28, %c0_29, %c0_30] : memref<4x8x8xf32, #tpu.memory_space<vmem>>, vector<4x8x8xf32>
    %70 = vector.broadcast %59 : vector<4x8x1xf32> to vector<4x8x8xf32>
    %71 = arith.mulf %70, %69 : vector<4x8x8xf32>
    %72 = arith.truncf %62 : vector<4x8x8xf32> to vector<4x8x8xbf16>
    %c0_31 = arith.constant 0 : index
    %c0_32 = arith.constant 0 : index
    %c0_33 = arith.constant 0 : index
    %c0_34 = arith.constant 0 : index
    %73 = vector.load %arg5[%c0_31, %c0_32, %c0_33, %c0_34] : memref<1x4x8x8xbf16, #tpu.memory_space<vmem>>, vector<1x4x8x8xbf16>
    %74 = vector.shape_cast %73 : vector<1x4x8x8xbf16> to vector<4x8x8xbf16>
    "tpu.trace_start"() <{level = 10 : i32, message = "hqk,hkd->hqd"}> : () -> ()
    %cst_35 = arith.constant dense<0.000000e+00> : vector<4x8x8xf32>
    %75 = tpu.matmul %72, %74, %cst_35 {dimension_numbers = #tpu.dot_dimension_numbers<[2], [1], [1], [2], [0, 0, 0, 1, 1, 2], [0], [0]>} : vector<4x8x8xbf16>, vector<4x8x8xbf16>, vector<4x8x8xf32> -> vector<4x8x8xf32>
    "tpu.trace_stop"() : () -> ()
    %76 = arith.addf %71, %75 : vector<4x8x8xf32>
    %c0_36 = arith.constant 0 : index
    %c0_37 = arith.constant 0 : index
    %c0_38 = arith.constant 0 : index
    %77 = vector.load %arg20[%c0_36, %c0_37, %c0_38] : memref<4x8x8xf32, #tpu.memory_space<vmem>>, vector<4x8x8xf32>
    tpu.vector_store %arg20[%c0_36, %c0_37, %c0_38], %76 {strides = array<i32>} : memref<4x8x8xf32, #tpu.memory_space<vmem>>, vector<4x8x8xf32>,
    %c0_39 = arith.constant 0 : index
    %c0_40 = arith.constant 0 : index
    %c0_41 = arith.constant 0 : index
    %78 = vector.load %arg18[%c0_39, %c0_40, %c0_41] : memref<4x8x1xf32, #tpu.memory_space<vmem>>, vector<4x8x1xf32>
    tpu.vector_store %arg18[%c0_39, %c0_40, %c0_41], %57 {strides = array<i32>} : memref<4x8x1xf32, #tpu.memory_space<vmem>>, vector<4x8x1xf32>,
    %c0_i32_42 = arith.constant 0 : i32
    %79 = arith.cmpi eq, %arg2, %c0_i32_42 : i32
    %80 = arith.extui %79 : i1 to i32
    %c0_i32_43 = arith.constant 0 : i32
    %81 = arith.cmpi ne, %80, %c0_i32_43 : i32
    scf.if %81 {
      %c0_44 = arith.constant 0 : index
      %c0_45 = arith.constant 0 : index
      %c0_46 = arith.constant 0 : index
      %82 = vector.load %arg20[%c0_44, %c0_45, %c0_46] : memref<4x8x8xf32, #tpu.memory_space<vmem>>, vector<4x8x8xf32>
      %c0_47 = arith.constant 0 : index
      %c0_48 = arith.constant 0 : index
      %c0_49 = arith.constant 0 : index
      %83 = vector.load %arg19[%c0_47, %c0_48, %c0_49] : memref<4x8x1xf32, #tpu.memory_space<vmem>>, vector<4x8x1xf32>
      %84 = tpu.reciprocal %83 {approx = true} : vector<4x8x1xf32> -> vector<4x8x1xf32>
      %85 = vector.broadcast %84 : vector<4x8x1xf32> to vector<4x8x8xf32>
      %86 = arith.mulf %82, %85 : vector<4x8x8xf32>
      %87 = arith.truncf %86 : vector<4x8x8xf32> to vector<4x8x8xbf16>
      %c0_50 = arith.constant 0 : index
      %c0_51 = arith.constant 0 : index
      %c0_52 = arith.constant 0 : index
      %88 = vector.load %arg10[%c0_50, %c0_51, %c0_52] : memref<4x8x32xbf16, #tpu.memory_space<vmem>>, vector<4x8x32xbf16>
      "tpu.trace_start"() <{level = 10 : i32, message = "hqd,hde->hqe"}> : () -> ()
      %cst_53 = arith.constant dense<0.000000e+00> : vector<4x8x32xf32>
      %89 = tpu.matmul %87, %88, %cst_53 {dimension_numbers = #tpu.dot_dimension_numbers<[2], [1], [1], [2], [0, 0, 0, 1, 1, 2], [0], [0]>} : vector<4x8x8xbf16>, vector<4x8x32xbf16>, vector<4x8x32xf32> -> vector<4x8x32xf32>
      "tpu.trace_stop"() : () -> ()
      %cst_54 = arith.constant dense<0.000000e+00> : vector<8x32xf32>
      %90 = vector.multi_reduction <add>, %89, %cst_54 [0] : vector<4x8x32xf32> to vector<8x32xf32>
      %c0_55 = arith.constant 0 : index
      %c0_56 = arith.constant 0 : index
      %91 = vector.load %arg11[%c0_55, %c0_56] : memref<1x32xf32, #tpu.memory_space<vmem>>, vector<1x32xf32>
      %92 = vector.broadcast %91 : vector<1x32xf32> to vector<8x32xf32>
      %93 = arith.addf %90, %92 : vector<8x32xf32>
      %c0_57 = arith.constant 0 : index
      %c0_58 = arith.constant 0 : index
      %c0_59 = arith.constant 0 : index
      %94 = vector.load %arg9[%c0_57, %c0_58, %c0_59] : memref<1x8x32xf32, #tpu.memory_space<vmem>>, vector<1x8x32xf32>
      %95 = vector.shape_cast %94 : vector<1x8x32xf32> to vector<8x32xf32>
      %96 = arith.addf %95, %93 : vector<8x32xf32>
      %c0_60 = arith.constant 0 : index
      %c0_61 = arith.constant 0 : index
      %97 = vector.load %arg12[%c0_60, %c0_61] : memref<1x32xf32, #tpu.memory_space<vmem>>, vector<1x32xf32>
      %98 = arith.mulf %96, %96 : vector<8x32xf32>
      %cst_62 = arith.constant dense<0.000000e+00> : vector<8xf32>
      %99 = vector.multi_reduction <add>, %98, %cst_62 [1] : vector<8x32xf32> to vector<8xf32>
      %100 = vector.shape_cast %99 : vector<8xf32> to vector<8x1xf32>
      %cst_63 = arith.constant 3.200000e+01 : f32
      %101 = vector.broadcast %cst_63 : f32 to vector<8x1xf32>
      %102 = arith.divf %100, %101 : vector<8x1xf32>
      %cst_64 = arith.constant 9.99999997E-7 : f32
      %103 = vector.broadcast %cst_64 : f32 to vector<8x1xf32>
      %104 = arith.addf %102, %103 : vector<8x1xf32>
      %105 = math.rsqrt %104 : vector<8x1xf32>
      %106 = vector.broadcast %105 : vector<8x1xf32> to vector<8x32xf32>
      %107 = arith.mulf %96, %106 : vector<8x32xf32>
      %108 = vector.broadcast %97 : vector<1x32xf32> to vector<8x32xf32>
      %109 = arith.mulf %107, %108 : vector<8x32xf32>
      %110 = arith.truncf %109 : vector<8x32xf32> to vector<8x32xbf16>
      %c0_65 = arith.constant 0 : index
      %c0_66 = arith.constant 0 : index
      %111 = vector.load %arg13[%c0_65, %c0_66] : memref<32x32xbf16, #tpu.memory_space<vmem>>, vector<32x32xbf16>
      %cst_67 = arith.constant dense<0.000000e+00> : vector<8x32xf32>
      %112 = tpu.matmul %110, %111, %cst_67 {dimension_numbers = #tpu.dot_dimension_numbers<[1], [0], [0], [1], [0, 0, 1, 1], [], []>} : vector<8x32xbf16>, vector<32x32xbf16>, vector<8x32xf32> -> vector<8x32xf32>
      %c0_68 = arith.constant 0 : index
      %c0_69 = arith.constant 0 : index
      %113 = vector.load %arg14[%c0_68, %c0_69] : memref<1x32xf32, #tpu.memory_space<vmem>>, vector<1x32xf32>
      %114 = vector.broadcast %113 : vector<1x32xf32> to vector<8x32xf32>
      %115 = arith.addf %112, %114 : vector<8x32xf32>
      %cst_70 = arith.constant 5.000000e-01 : f32
      %116 = vector.broadcast %cst_70 : f32 to vector<8x32xf32>
      %117 = arith.mulf %116, %115 : vector<8x32xf32>
      %cst_71 = arith.constant 0.707106769 : f32
      %118 = vector.broadcast %cst_71 : f32 to vector<8x32xf32>
      %119 = arith.mulf %115, %118 : vector<8x32xf32>
      %cst_72 = arith.constant 0.000000e+00 : f32
      %120 = vector.broadcast %cst_72 : f32 to vector<8x32xf32>
      %121 = arith.cmpf oge, %119, %120 : vector<8x32xf32>
      %cst_73 = arith.constant 1.000000e+00 : f32
      %cst_74 = arith.constant -1.000000e+00 : f32
      %122 = vector.broadcast %cst_73 : f32 to vector<8x32xf32>
      %123 = vector.broadcast %cst_74 : f32 to vector<8x32xf32>
      %124 = arith.select %121, %122, %123 : vector<8x32xi1>, vector<8x32xf32>
      %125 = math.absf %119 : vector<8x32xf32>
      %cst_75 = arith.constant 0.327591091 : f32
      %126 = vector.broadcast %cst_75 : f32 to vector<8x32xf32>
      %127 = arith.mulf %126, %125 : vector<8x32xf32>
      %cst_76 = arith.constant 1.000000e+00 : f32
      %128 = vector.broadcast %cst_76 : f32 to vector<8x32xf32>
      %129 = arith.addf %128, %127 : vector<8x32xf32>
      %cst_77 = arith.constant 1.000000e+00 : f32
      %130 = vector.broadcast %cst_77 : f32 to vector<8x32xf32>
      %131 = arith.divf %130, %129 : vector<8x32xf32>
      %cst_78 = arith.constant 1.06140542 : f32
      %132 = vector.broadcast %cst_78 : f32 to vector<8x32xf32>
      %133 = arith.mulf %132, %131 : vector<8x32xf32>
      %cst_79 = arith.constant -1.45315206 : f32
      %134 = vector.broadcast %cst_79 : f32 to vector<8x32xf32>
      %135 = arith.addf %133, %134 : vector<8x32xf32>
      %136 = arith.mulf %135, %131 : vector<8x32xf32>
      %cst_80 = arith.constant 1.42141378 : f32
      %137 = vector.broadcast %cst_80 : f32 to vector<8x32xf32>
      %138 = arith.addf %136, %137 : vector<8x32xf32>
      %139 = arith.mulf %138, %131 : vector<8x32xf32>
      %cst_81 = arith.constant -0.284496725 : f32
      %140 = vector.broadcast %cst_81 : f32 to vector<8x32xf32>
      %141 = arith.addf %139, %140 : vector<8x32xf32>
      %142 = arith.mulf %141, %131 : vector<8x32xf32>
      %cst_82 = arith.constant 0.254829586 : f32
      %143 = vector.broadcast %cst_82 : f32 to vector<8x32xf32>
      %144 = arith.addf %142, %143 : vector<8x32xf32>
      %145 = arith.mulf %144, %131 : vector<8x32xf32>
      %cst_83 = arith.constant 0.000000e+00 : f32
      %146 = vector.broadcast %cst_83 : f32 to vector<8x32xf32>
      %147 = arith.subf %146, %125 : vector<8x32xf32>
      %148 = arith.mulf %147, %125 : vector<8x32xf32>
      %149 = math.exp %148 : vector<8x32xf32>
      %150 = arith.mulf %145, %149 : vector<8x32xf32>
      %cst_84 = arith.constant 1.000000e+00 : f32
      %151 = vector.broadcast %cst_84 : f32 to vector<8x32xf32>
      %152 = arith.subf %151, %150 : vector<8x32xf32>
      %153 = arith.mulf %124, %152 : vector<8x32xf32>
      %cst_85 = arith.constant 1.000000e+00 : f32
      %154 = vector.broadcast %cst_85 : f32 to vector<8x32xf32>
      %155 = arith.addf %154, %153 : vector<8x32xf32>
      %156 = arith.mulf %117, %155 : vector<8x32xf32>
      %157 = arith.truncf %156 : vector<8x32xf32> to vector<8x32xbf16>
      %c0_86 = arith.constant 0 : index
      %c0_87 = arith.constant 0 : index
      %158 = vector.load %arg15[%c0_86, %c0_87] : memref<32x32xbf16, #tpu.memory_space<vmem>>, vector<32x32xbf16>
      %cst_88 = arith.constant dense<0.000000e+00> : vector<8x32xf32>
      %159 = tpu.matmul %157, %158, %cst_88 {dimension_numbers = #tpu.dot_dimension_numbers<[1], [0], [0], [1], [0, 0, 1, 1], [], []>} : vector<8x32xbf16>, vector<32x32xbf16>, vector<8x32xf32> -> vector<8x32xf32>
      %c0_89 = arith.constant 0 : index
      %c0_90 = arith.constant 0 : index
      %160 = vector.load %arg16[%c0_89, %c0_90] : memref<1x32xf32, #tpu.memory_space<vmem>>, vector<1x32xf32>
      %161 = vector.broadcast %160 : vector<1x32xf32> to vector<8x32xf32>
      %162 = arith.addf %159, %161 : vector<8x32xf32>
      %163 = arith.addf %96, %162 : vector<8x32xf32>
      %c0_91 = arith.constant 0 : index
      %c0_92 = arith.constant 0 : index
      %c0_93 = arith.constant 0 : index
      %164 = vector.load %arg17[%c0_91, %c0_92, %c0_93] : memref<1x8x32xf32, #tpu.memory_space<vmem>>, vector<1x8x32xf32>
      %165 = vector.shape_cast %164 : vector<1x8x32xf32> to vector<8x32xf32>
      %166 = vector.shape_cast %163 : vector<8x32xf32> to vector<1x8x32xf32>
      tpu.vector_store %arg17[%c0_91, %c0_92, %c0_93], %166 {strides = array<i32>} : memref<1x8x32xf32, #tpu.memory_space<vmem>>, vector<1x8x32xf32>,
    } else {
    }
    return
  }
  func.func @transform_0(%arg0: i32, %arg1: i32, %arg2: i32) -> (i32, i32, i32, i32) {
    %c0_i32 = arith.constant 0 : i32
    %c0_i32_0 = arith.constant 0 : i32
    %c0_i32_1 = arith.constant 0 : i32
    return %arg0, %c0_i32, %arg1, %c0_i32_0 : i32, i32, i32, i32
  }
  func.func @transform_1(%arg0: i32, %arg1: i32, %arg2: i32) -> (i32, i32, i32, i32) {
    %c0_i32 = arith.constant 0 : i32
    %c0_i32_0 = arith.constant 0 : i32
    %c0_i32_1 = arith.constant 0 : i32
    return %arg0, %c0_i32, %arg2, %c0_i32_0 : i32, i32, i32, i32
  }
  func.func @transform_2(%arg0: i32, %arg1: i32, %arg2: i32) -> (i32, i32, i32, i32) {
    %c0_i32 = arith.constant 0 : i32
    %c0_i32_0 = arith.constant 0 : i32
    %c0_i32_1 = arith.constant 0 : i32
    return %arg0, %c0_i32, %arg2, %c0_i32_0 : i32, i32, i32, i32
  }
  func.func @transform_3(%arg0: i32, %arg1: i32, %arg2: i32) -> (i32, i32) {
    %c0_i32 = arith.constant 0 : i32
    return %arg1, %arg2 : i32, i32
  }
  func.func @transform_4(%arg0: i32, %arg1: i32, %arg2: i32) -> (i32, i32, i32) {
    %c0_i32 = arith.constant 0 : i32
    %c0_i32_0 = arith.constant 0 : i32
    %c0_i32_1 = arith.constant 0 : i32
    %c0_i32_2 = arith.constant 0 : i32
    return %c0_i32, %c0_i32_0, %c0_i32_1 : i32, i32, i32
  }
  func.func @transform_5(%arg0: i32, %arg1: i32, %arg2: i32) -> (i32, i32, i32) {
    %c0_i32 = arith.constant 0 : i32
    %c0_i32_0 = arith.constant 0 : i32
    %c0_i32_1 = arith.constant 0 : i32
    %c0_i32_2 = arith.constant 0 : i32
    return %c0_i32, %c0_i32_0, %c0_i32_1 : i32, i32, i32
  }
  func.func @transform_6(%arg0: i32, %arg1: i32, %arg2: i32) -> (i32, i32, i32) {
    %c0_i32 = arith.constant 0 : i32
    %c0_i32_0 = arith.constant 0 : i32
    return %arg0, %arg1, %c0_i32 : i32, i32, i32
  }
  func.func @transform_7(%arg0: i32, %arg1: i32, %arg2: i32) -> (i32, i32, i32) {
    %c0_i32 = arith.constant 0 : i32
    %c0_i32_0 = arith.constant 0 : i32
    %c0_i32_1 = arith.constant 0 : i32
    %c0_i32_2 = arith.constant 0 : i32
    return %c0_i32, %c0_i32_0, %c0_i32_1 : i32, i32, i32
  }
  func.func @transform_8(%arg0: i32, %arg1: i32, %arg2: i32) -> (i32, i32) {
    %c0_i32 = arith.constant 0 : i32
    %c0_i32_0 = arith.constant 0 : i32
    %c0_i32_1 = arith.constant 0 : i32
    return %c0_i32, %c0_i32_0 : i32, i32
  }
  func.func @transform_9(%arg0: i32, %arg1: i32, %arg2: i32) -> (i32, i32) {
    %c0_i32 = arith.constant 0 : i32
    %c0_i32_0 = arith.constant 0 : i32
    %c0_i32_1 = arith.constant 0 : i32
    return %c0_i32, %c0_i32_0 : i32, i32
  }
  func.func @transform_10(%arg0: i32, %arg1: i32, %arg2: i32) -> (i32, i32) {
    %c0_i32 = arith.constant 0 : i32
    %c0_i32_0 = arith.constant 0 : i32
    %c0_i32_1 = arith.constant 0 : i32
    return %c0_i32, %c0_i32_0 : i32, i32
  }
  func.func @transform_11(%arg0: i32, %arg1: i32, %arg2: i32) -> (i32, i32) {
    %c0_i32 = arith.constant 0 : i32
    %c0_i32_0 = arith.constant 0 : i32
    %c0_i32_1 = arith.constant 0 : i32
    return %c0_i32, %c0_i32_0 : i32, i32
  }
  func.func @transform_12(%arg0: i32, %arg1: i32, %arg2: i32) -> (i32, i32) {
    %c0_i32 = arith.constant 0 : i32
    %c0_i32_0 = arith.constant 0 : i32
    %c0_i32_1 = arith.constant 0 : i32
    return %c0_i32, %c0_i32_0 : i32, i32
  }
  func.func @transform_13(%arg0: i32, %arg1: i32, %arg2: i32) -> (i32, i32) {
    %c0_i32 = arith.constant 0 : i32
    %c0_i32_0 = arith.constant 0 : i32
    %c0_i32_1 = arith.constant 0 : i32
    return %c0_i32, %c0_i32_0 : i32, i32
  }
  func.func @transform_14(%arg0: i32, %arg1: i32, %arg2: i32) -> (i32, i32, i32) {
    %c0_i32 = arith.constant 0 : i32
    %c0_i32_0 = arith.constant 0 : i32
    return %arg0, %arg1, %c0_i32 : i32, i32, i32
  }
}

</mosaic_0001>

<llo_original>
// kernel: neg.1
$region0: #{neg.1}
  #allocation0 [shape = 's32[1]{0}', space=sflag, size = 0x4, scoped, tag = 'scoped memory for neg.1']
  %s0 = inlined_call_operand.vmem [shape: f32[4,4], index: 0, kind: input, shape index: {}]
  %s1 = inlined_call_operand.vmem [shape: f32[4,4], index: 1, kind: output, shape index: {}]
  %v2 = vld [vmem:[%s0] sm:$0xf]
  %3 = xla_tuple %v2
  %4 = xla_tuple %3
  %v5 = vxor.u32 %v2, 2147483648
  %6 = xla_tuple %v5
  %7 = vst [vmem:[%s1] sm:$0xf] %v5

// kernel: transformer_layer.2
$region0: #{transformer_layer.2}
  #allocation0 [shape = 'u32[]', space=smem, size = 0x4, offset = 0x4, fixed_abs, tag = 'smem constant byte address 0x4 - core index']
  #allocation1 [shape = 'u32[144,128]{1,0:T(1,128)}', space=vmem, size = 0x12000, scoped, tag = 'internal scratch']
  %s0 = inlined_call_operand.vmem [shape: f32[2,8,32], index: 0, kind: input, shape index: {}]
  %s1 = inlined_call_operand.vmem [shape: f32[1,32], index: 1, kind: input, shape index: {}]
  %s2 = inlined_call_operand.vmem [shape: bf16[32,96], index: 2, kind: input, shape index: {}]
  %s3 = inlined_call_operand.vmem [shape: f32[1,96], index: 3, kind: input, shape index: {}]
  %s4 = inlined_call_operand.vmem [shape: bf16[2,8,96], index: 4, kind: output, shape index: {}]
  %s5 = sld [smem:[#allocation0]]
  $region49: #{transformer_layer.2} parent=0
    _
  %s7 = ssub.s32 1, %s5
  %s8 = scalar_select 0, %s7, %s5
  loop: start=0, step=1, limit=4
  $region2: #{transformer_layer.2} parent=0 // loop_pre_header
    _
  $region3: #{transformer_layer.2} parent=0 // loop_header
    %s10 = sphi 0, %s14
    %p11 = scmp.ge.s32.totalorder %s10, 4
    %s17 = sphi 0, %s29
    %s18 = sphi 0, %s25
    %s19 = sphi 0, %s17
    %s20 = sphi 0, %s18
    %s21 = sphi 0, %s19
    %s22 = sphi 0, %s20
    %s34 = sphi 0, %s36
    %s37 = sphi 0, %s34
    %s38 = sphi 0, %s37
    %s54 = sphi 0, %s38
    %s58 = sphi 0, %s58
    %s60 = sphi 0, %s58
    %s61 = sphi 0, %s60
    %s75 = sphi 0, %s61
    %s79 = sphi 0, %s79
    %s81 = sphi 0, %s79
    %s82 = sphi 0, %s81
    %s96 = sphi 0, %s82
    %s100 = sphi 0, %s100
    %s102 = sphi 0, %s100
    %s103 = sphi 0, %s102
    %s117 = sphi 0, %s103
    %s125 = sphi 0, %s127
    %s128 = sphi 0, %s125
    %s129 = sphi 0, %s128
    %s145 = sphi 0, %s129
  $region4: #{transformer_layer.2} parent=0 // loop_header_branch
    %13 = sbr.rel (%p11) target = $region8
  $region5: #{transformer_layer.2} parent=0 // loop_body
    %s15 = ssub.s32 %s10, 1
    %s16 = ssub.s32 %s10, 2
    %s23 = sadd.s32 1, %s18
    %p24 = scmp.ge.s32.totalorder %s23, 1
    %s25 = scalar_select %p24, 0, %s23
    %s26 = sadd.s32 1, %s17
    %s27 = scalar_select %p24, %s26, %s17
    %p28 = scmp.ge.s32.totalorder %s27, 2
    %s29 = scalar_select %p28, 0, %s27
    %s30 = ssub.s32 %s17, %s29
    %s31 = ssub.s32 %s18, %s25
    %s32 = sor.u32 %s30, %s31
    %p33 = scmp.eq.s32.totalorder %s32, 0
    %s35 = sadd.s32 %s34, 1
    %s36 = scalar_select %p33, %s34, %s35
    %p39 = pneg %p33
    %p40 = scmp.eq.s32.totalorder %s10, 1
    %p41 = por %p39, %p40
    %p42 = scmp.ne.s32.totalorder %s34, %s37
    %p43 = scmp.eq.s32.totalorder %s10, 0
    %p44 = por %p42, %p43
    %p45 = scmp.ne.s32.totalorder %s34, %s37
    %p46 = scmp.eq.s32.totalorder %s15, 1
    %p47 = por %p45, %p46
    %p48 = scmp.ne.s32.totalorder %s37, %s38
    %p49 = scmp.eq.s32.totalorder %s15, 0
    %p50 = por %p48, %p49
    %p51 = scmp.ne.s32.totalorder %s37, %s38
    %p52 = scmp.eq.s32.totalorder %s16, 1
    %p53 = por %p51, %p52
    %p55 = scmp.ne.s32.totalorder %s38, %s54
    %p56 = scmp.eq.s32.totalorder %s16, 0
    %p57 = por %p55, %p56
    %s59 = sadd.s32 %s58, 1
    %p62 = scmp.eq.s32.totalorder %s10, 1
    %p63 = scmp.ne.s32.totalorder %s58, %s60
    %p64 = scmp.eq.s32.totalorder %s10, 0
    %p65 = por %p63, %p64
    %p66 = scmp.ne.s32.totalorder %s58, %s60
    %p67 = scmp.eq.s32.totalorder %s15, 1
    %p68 = por %p66, %p67
    %p69 = scmp.ne.s32.totalorder %s60, %s61
    %p70 = scmp.eq.s32.totalorder %s15, 0
    %p71 = por %p69, %p70
    %p72 = scmp.ne.s32.totalorder %s60, %s61
    %p73 = scmp.eq.s32.totalorder %s16, 1
    %p74 = por %p72, %p73
    %p76 = scmp.ne.s32.totalorder %s61, %s75
    %p77 = scmp.eq.s32.totalorder %s16, 0
    %p78 = por %p76, %p77
    %s80 = sadd.s32 %s79, 1
    %p83 = scmp.eq.s32.totalorder %s10, 1
    %p84 = scmp.ne.s32.totalorder %s79, %s81
    %p85 = scmp.eq.s32.totalorder %s10, 0
    %p86 = por %p84, %p85
    %p87 = scmp.ne.s32.totalorder %s79, %s81
    %p88 = scmp.eq.s32.totalorder %s15, 1
    %p89 = por %p87, %p88
    %p90 = scmp.ne.s32.totalorder %s81, %s82
    %p91 = scmp.eq.s32.totalorder %s15, 0
    %p92 = por %p90, %p91
    %p93 = scmp.ne.s32.totalorder %s81, %s82
    %p94 = scmp.eq.s32.totalorder %s16, 1
    %p95 = por %p93, %p94
    %p97 = scmp.ne.s32.totalorder %s82, %s96
    %p98 = scmp.eq.s32.totalorder %s16, 0
    %p99 = por %p97, %p98
    %s101 = sadd.s32 %s100, 1
    %p104 = scmp.eq.s32.totalorder %s10, 1
    %p105 = scmp.ne.s32.totalorder %s100, %s102
    %p106 = scmp.eq.s32.totalorder %s10, 0
    %p107 = por %p105, %p106
    %p108 = scmp.ne.s32.totalorder %s100, %s102
    %p109 = scmp.eq.s32.totalorder %s15, 1
    %p110 = por %p108, %p109
    %p111 = scmp.ne.s32.totalorder %s102, %s103
    %p112 = scmp.eq.s32.totalorder %s15, 0
    %p113 = por %p111, %p112
    %p114 = scmp.ne.s32.totalorder %s102, %s103
    %p115 = scmp.eq.s32.totalorder %s16, 1
    %p116 = por %p114, %p115
    %p118 = scmp.ne.s32.totalorder %s103, %s117
    %p119 = scmp.eq.s32.totalorder %s16, 0
    %p120 = por %p118, %p119
    %s121 = ssub.s32 %s17, %s29
    %s122 = ssub.s32 %s18, %s25
    %s123 = sor.u32 %s121, %s122
    %p124 = scmp.eq.s32.totalorder %s123, 0
    %s126 = sadd.s32 %s125, 1
    %s127 = scalar_select %p124, %s125, %s126
    %p130 = pneg %p124
    %p131 = scmp.eq.s32.totalorder %s10, 1
    %p132 = por %p130, %p131
    %p133 = scmp.ne.s32.totalorder %s125, %s128
    %p134 = scmp.eq.s32.totalorder %s10, 0
    %p135 = por %p133, %p134
    %p136 = scmp.ne.s32.totalorder %s125, %s128
    %p137 = scmp.eq.s32.totalorder %s15, 1
    %p138 = por %p136, %p137
    %p139 = scmp.ne.s32.totalorder %s128, %s129
    %p140 = scmp.eq.s32.totalorder %s15, 0
    %p141 = por %p139, %p140
    %p142 = scmp.ne.s32.totalorder %s128, %s129
    %p143 = scmp.eq.s32.totalorder %s16, 1
    %p144 = por %p142, %p143
    %p146 = scmp.ne.s32.totalorder %s129, %s145
    %p147 = scmp.eq.s32.totalorder %s16, 0
    %p148 = por %p146, %p147
    %p149 = scmp.le.s32.totalorder 1, %s10
    %p150 = scmp.lt.s32.totalorder %s10, 3
    %p151 = pnand %p149, %p150
    %p152 = pneg %p151
    // Predicated region
    $region9: #{transformer_layer.2} parent=5 // pred_check
      _
    $region10: #{transformer_layer.2} parent=5 // pred_check_branch
      %154 = sbr.rel (%p151) target = $region12
    $region11: #{transformer_layer.2} parent=5 // pred_region
      %s155 = ssub.s32 %s10, 1
      // Predicated region
      $region13: #{transformer_layer.2} parent=11 // pred_check
        %p156 = pneg %p71
      $region14: #{transformer_layer.2} parent=11 // pred_check_branch
        %158 = sbr.rel (%p156) target = $region16
      $region15: #{transformer_layer.2} parent=11 // pred_region
        _
      $region16: #{transformer_layer.2} parent=11 // pred_fallthru
        _
      // Predicated region
      $region17: #{transformer_layer.2} parent=11 // pred_check
        %p159 = pneg %p92
      $region18: #{transformer_layer.2} parent=11 // pred_check_branch
        %161 = sbr.rel (%p159) target = $region20
      $region19: #{transformer_layer.2} parent=11 // pred_region
        _
      $region20: #{transformer_layer.2} parent=11 // pred_fallthru
        _
      // Predicated region
      $region21: #{transformer_layer.2} parent=11 // pred_check
        %p162 = pneg %p113
      $region22: #{transformer_layer.2} parent=11 // pred_check_branch
        %164 = sbr.rel (%p162) target = $region24
      $region23: #{transformer_layer.2} parent=11 // pred_region
        _
      $region24: #{transformer_layer.2} parent=11 // pred_fallthru
        _
    $region12: #{transformer_layer.2} parent=5 // pred_fallthru
      _
    %p165 = scmp.lt.s32.totalorder %s10, 2
    // Predicated region
    $region25: #{transformer_layer.2} parent=5 // pred_check
      %p166 = pneg %p165
    $region26: #{transformer_layer.2} parent=5 // pred_check_branch
      %168 = sbr.rel (%p166) target = $region28
    $region27: #{transformer_layer.2} parent=5 // pred_region
      // Predicated region
      $region29: #{transformer_layer.2} parent=27 // pred_check
        %p169 = pneg %p44
      $region30: #{transformer_layer.2} parent=27 // pred_check_branch
        %171 = sbr.rel (%p169) target = $region32
      $region31: #{transformer_layer.2} parent=27 // pred_region
        %p172 = scmp.lt.s32.totalorder %s17, 1
        %s173 = scalar_select %p172, %s17, 1
        %p174 = scmp.lt.s32.totalorder %s18, 0
        %s175 = scalar_select %p174, %s18, 0
        %s176 = sadd.s32 %s175, %s173
        %s177 = smul.addr %s176, 8
        %s178 = scalar_lea.vmem %s0, %s177
      $region32: #{transformer_layer.2} parent=27 // pred_fallthru
        _
    $region28: #{transformer_layer.2} parent=5 // pred_fallthru
      _
    %p179 = scmp.le.s32.totalorder 1, %s10
    %p180 = scmp.lt.s32.totalorder %s10, 3
    %p181 = pnand %p179, %p180
    %p182 = pneg %p181
    // Predicated region
    $region33: #{transformer_layer.2} parent=5 // pred_check
      _
    $region34: #{transformer_layer.2} parent=5 // pred_check_branch
      %184 = sbr.rel (%p181) target = $region36
    $region35: #{transformer_layer.2} parent=5 // pred_region
      %s185 = ssub.s32 %s10, 1
      %p186 = scmp.lt.s32.totalorder %s19, 1
      %s187 = scalar_select %p186, %s19, 1
      %p188 = scmp.lt.s32.totalorder %s20, 0
      %s189 = scalar_select %p188, %s20, 0
      %s190 = sadd.s32 %s189, %s187
      %s191 = smul.addr %s190, 8
      %s192 = scalar_lea.vmem %s0, %s191
      %p193 = pneg %p50
      %p194 = pneg %p47
      %p195 = pneg %p71
      %p196 = pneg %p68
      %p197 = pneg %p92
      %p198 = pneg %p89
      %p199 = pneg %p113
      %p200 = pneg %p110
      %p201 = pneg %p141
      %p202 = pneg %p138
      %p203 = scmp.lt.s32.totalorder %s19, 1
      %s204 = scalar_select %p203, %s19, 1
      %p205 = scmp.lt.s32.totalorder %s20, 0
      %s206 = scalar_select %p205, %s20, 0
      %s207 = sadd.s32 %s206, %s204
      %s208 = smul.addr %s207, 4
      %s209 = scalar_lea.vmem %s4, %s208
      %p210 = scmp.lt.s32.totalorder %s19, 1
      %s211 = scalar_select %p210, %s19, 1
      %p212 = scmp.lt.s32.totalorder %s20, 0
      %s213 = scalar_select %p212, %s20, 0
      %s214 = sadd.s32 %s213, %s211
      %s215 = smul.addr %s214, 8
      %s216 = scalar_lea.vmem %s0, %s215
      %p217 = scmp.lt.s32.totalorder %s19, 1
      %s218 = scalar_select %p217, %s19, 1
      %p219 = scmp.lt.s32.totalorder %s20, 0
      %s220 = scalar_select %p219, %s20, 0
      %s221 = sadd.s32 %s220, %s218
      %s222 = smul.addr %s221, 4
      %s223 = scalar_lea.vmem %s4, %s222
      %v225 = vld [vmem:[%s216] sm:$0xff]
      %v226 = vld [vmem:[%s1] sm:$0x1]
      %v227 = vmul.f32 %v225, %v225
      %vm228 = vcmask 261120
      %v229 = vsel %vm228, %v227, 0.0
      %230 = vadd.xlane.f32.xlu0 %v229
      %v231 = vpop.xlane.xlu0 %230
      %v232 = vrcp.pop 32.0
      %v233 = vmul.f32 %v231, %v232
      %v234 = vadd.f32 %v233, 1e-06
      %v235 = vrsqrt.pop %v234
      %v236 = vmul.f32 %v225, %v235
      %v238 = vlaneseq
      %v239 = vshrl.u32 %v238, 7
      %v240 = vsub.s32 0, %v239
      %v241 = vrot.slane %v226, %v240
      %v243 = vmul.f32 %v236, %v241
      %v244 = vpack.c.bf16 %v243, %v243
      %v245 = vld [vmem:[%s2] sm:$0xf]
      %v246 = vld [vmem:[%s2 + $0x4] sm:$0xf]
      %v247 = vld [vmem:[%s2 + $0x8] sm:$0xf]
      %v248 = vld [vmem:[%s2 + $0xc] sm:$0xf]
      %v249 = vld [vmem:[%s3] sm:$0x1]
      %v251 = vlaneseq
      %v252 = vshrl.u32 %v251, 7
      %v253 = vsub.s32 0, %v252
      %v254 = vrot.slane %v249, %v253
      %v260 = vunpack.c.l.b16 %v245
      %v261 = vunpack.c.l.b16 %v246
      %v262 = vunpack.c.l.b16 %v247
      %v263 = vunpack.c.l.b16 %v248
      %v264 = vpack.c.b16 %v261, %v260
      %v265 = vpack.c.b16 %v263, %v262
      %v269 = vsel %vm228, %v244, 0
      %271 = vmatprep.subr.bf16.mxu0 0
      %272 = vmatpush1.bf16.msra.mxu0 %v264
      %273 = vmatprep.subr.bf16.mxu0 0
      %274 = vmatpush1.bf16.msra.mxu0 %v265
      %275 = vmatprep.subr.bf16.mxu0 0
      %276 = vmatpush1.bf16.msra.mxu0 0
      %277 = vmatprep.subr.bf16.mxu0 0
      %278 = vmatpush1.bf16.msra.mxu0 0
      %279 = vmatprep.subr.bf16.mxu0 0
      %280 = vmatpush1.bf16.msra.mxu0 0
      %281 = vmatprep.subr.bf16.mxu0 0
      %282 = vmatpush1.bf16.msra.mxu0 0
      %283 = vmatprep.subr.bf16.mxu0 0
      %284 = vmatpush1.bf16.msra.mxu0 0
      %285 = vmatprep.subr.bf16.mxu0 0
      %286 = vmatpush1.bf16.msra.mxu0 0
      %287 = vmatprep.subr.bf16.mxu0 0
      %288 = vmatpush1.bf16.msra.mxu0 0
      %289 = vmatprep.subr.bf16.mxu0 0
      %290 = vmatpush1.bf16.msra.mxu0 0
      %291 = vmatprep.subr.bf16.mxu0 0
      %292 = vmatpush1.bf16.msra.mxu0 0
      %293 = vmatprep.subr.bf16.mxu0 0
      %294 = vmatpush1.bf16.msra.mxu0 0
      %295 = vmatprep.subr.bf16.mxu0 0
      %296 = vmatpush1.bf16.msra.mxu0 0
      %297 = vmatprep.subr.bf16.mxu0 0
      %298 = vmatpush1.bf16.msra.mxu0 0
      %299 = vmatprep.subr.bf16.mxu0 0
      %300 = vmatpush1.bf16.msra.mxu0 0
      %301 = vmatprep.subr.bf16.mxu0 0
      %302 = vmatpush1.bf16.msra.mxu0 0
      %303 = vmatprep.mubr.bf16.mxu0 0
      %304 = vmatmul.mubr.bf16.gmra.mrb[0].mxu0 %v269
      %v305 = vpop.f32.mrb[0].mxu0
      %v306 = vadd.f32 %v254, %v305
      %v307 = vpop.f32.mrb[0].mxu0
      %v308 = vpop.f32.mrb[0].mxu0
      %v309 = vpop.f32.mrb[0].mxu0
      %310 = vdwg.mxu0
      %v311 = vpack.c.bf16 %v306, %v306
      %vm312 = vcmask 781312
      %313 = vst.msk [vmem:[%s223] sm:$0xf] %vm312, %v311
      %p314 = scmp.lt.s32.totalorder %s19, 1
      %s315 = scalar_select %p314, %s19, 1
      %p316 = scmp.lt.s32.totalorder %s20, 0
      %s317 = scalar_select %p316, %s20, 0
      %s318 = sadd.s32 %s317, %s315
      %s319 = smul.addr %s318, 4
      %s320 = scalar_lea.vmem %s4, %s319
      // Predicated region
      $region37: #{transformer_layer.2} parent=35 // pred_check
        %p321 = pneg %p138
      $region38: #{transformer_layer.2} parent=35 // pred_check_branch
        %323 = sbr.rel (%p321) target = $region40
      $region39: #{transformer_layer.2} parent=35 // pred_region
        _
      $region40: #{transformer_layer.2} parent=35 // pred_fallthru
        _
    $region36: #{transformer_layer.2} parent=5 // pred_fallthru
      _
    %p324 = scmp.le.s32.totalorder 2, %s10
    // Predicated region
    $region41: #{transformer_layer.2} parent=5 // pred_check
      %p325 = pneg %p324
    $region42: #{transformer_layer.2} parent=5 // pred_check_branch
      %327 = sbr.rel (%p325) target = $region44
    $region43: #{transformer_layer.2} parent=5 // pred_region
      %s328 = ssub.s32 %s10, 2
      // Predicated region
      $region45: #{transformer_layer.2} parent=43 // pred_check
        %p329 = pneg %p144
      $region46: #{transformer_layer.2} parent=43 // pred_check_branch
        %331 = sbr.rel (%p329) target = $region48
      $region47: #{transformer_layer.2} parent=43 // pred_region
        %p332 = scmp.lt.s32.totalorder %s21, 1
        %s333 = scalar_select %p332, %s21, 1
        %p334 = scmp.lt.s32.totalorder %s22, 0
        %s335 = scalar_select %p334, %s22, 0
        %s336 = sadd.s32 %s335, %s333
        %s337 = smul.addr %s336, 4
        %s338 = scalar_lea.vmem %s4, %s337
      $region48: #{transformer_layer.2} parent=43 // pred_fallthru
        _
    $region44: #{transformer_layer.2} parent=5 // pred_fallthru
      _
  $region6: #{transformer_layer.2} parent=0 // loop_footer
    %s14 = sadd.s32 1, %s10
  $region7: #{transformer_layer.2} parent=0 // loop_footer_branch
    %9 = sbr.rel target = $region3
  $region8: #{transformer_layer.2} parent=0 // loop_exit
    _

// kernel: transformer_layer.3
$region0: #{transformer_layer.3}
  #allocation0 [shape = 'u32[]', space=smem, size = 0x4, offset = 0x4, fixed_abs, tag = 'smem constant byte address 0x4 - core index']
  #allocation1 [shape = 'u32[144,128]{1,0:T(1,128)}', space=vmem, size = 0x12000, scoped, tag = 'internal scratch']
  #allocation2 [shape = 'f32[4,8,1]{2,1,0:T(8,128)}', space=vmem, size = 0x4000, scoped, tag = 'scratch operand']
  #allocation3 [shape = 'f32[4,8,1]{2,1,0:T(8,128)}', space=vmem, size = 0x4000, scoped, tag = 'scratch operand']
  #allocation4 [shape = 'f32[4,8,8]{2,1,0:T(8,128)}', space=vmem, size = 0x4000, scoped, tag = 'scratch operand']
  %s0 = inlined_call_operand.vmem [shape: bf16[2,4,8,8], index: 0, kind: input, shape index: {}]
  %s1 = inlined_call_operand.vmem [shape: bf16[2,4,8,8], index: 1, kind: input, shape index: {}]
  %s2 = inlined_call_operand.vmem [shape: bf16[2,4,8,8], index: 2, kind: input, shape index: {}]
  %s3 = inlined_call_operand.vmem [shape: f32[8,8], index: 3, kind: input, shape index: {}]
  %s4 = inlined_call_operand.vmem [shape: f32[4,1,8], index: 4, kind: input, shape index: {}]
  %s5 = inlined_call_operand.vmem [shape: f32[4,1,8], index: 5, kind: input, shape index: {}]
  %s6 = inlined_call_operand.vmem [shape: f32[2,8,32], index: 6, kind: input, shape index: {}]
  %s7 = inlined_call_operand.vmem [shape: bf16[4,8,32], index: 7, kind: input, shape index: {}]
  %s8 = inlined_call_operand.vmem [shape: f32[1,32], index: 8, kind: input, shape index: {}]
  %s9 = inlined_call_operand.vmem [shape: f32[1,32], index: 9, kind: input, shape index: {}]
  %s10 = inlined_call_operand.vmem [shape: bf16[32,32], index: 10, kind: input, shape index: {}]
  %s11 = inlined_call_operand.vmem [shape: f32[1,32], index: 11, kind: input, shape index: {}]
  %s12 = inlined_call_operand.vmem [shape: bf16[32,32], index: 12, kind: input, shape index: {}]
  %s13 = inlined_call_operand.vmem [shape: f32[1,32], index: 13, kind: input, shape index: {}]
  %s14 = inlined_call_operand.hbm [shape: f32[2,8,32], index: 14, kind: output, shape index: {}]
  %s15 = sld [smem:[#allocation0]]
  $region97: #{transformer_layer.3} parent=0
    _
  %s17 = ssub.s32 1, %s15
  %s18 = scalar_select 0, %s17, %s15
  $region1: #{transformer_layer.3} parent=0
    #allocation5 [shape = 'u8[8192]{0}', space=vmem, size = 0x2000, scoped, tag = 'output window, operand 0']
    #allocation6 [shape = 's32[2]{0}', space=sflag, size = 0x8, scoped, tag = 'scoped memory for transformer_layer.3']
    %19 = vsyncpa [#allocation6], 0
    %s20 = scalar_lea.sflag [#allocation6], 1
    %21 = vsyncpa %s20, 0
    loop: start=0, step=1, limit=4
    $region2: #{transformer_layer.3} parent=1 // loop_pre_header
      _
    $region3: #{transformer_layer.3} parent=1 // loop_header
      %s23 = sphi 0, %s27
      %p24 = scmp.ge.s32.totalorder %s23, 4
      %s30 = sphi 0, %s49
      %s31 = sphi 0, %s45
      %s32 = sphi 0, %s41
      %s33 = sphi 0, %s30
      %s34 = sphi 0, %s31
      %s35 = sphi 0, %s32
      %s36 = sphi 0, %s33
      %s37 = sphi 0, %s34
      %s38 = sphi 0, %s35
      %s54 = sphi 0, %s56
      %s57 = sphi 0, %s54
      %s58 = sphi 0, %s57
      %s74 = sphi 0, %s58
      %s82 = sphi 0, %s84
      %s85 = sphi 0, %s82
      %s86 = sphi 0, %s85
      %s102 = sphi 0, %s86
      %s110 = sphi 0, %s112
      %s113 = sphi 0, %s110
      %s114 = sphi 0, %s113
      %s130 = sphi 0, %s114
      %s138 = sphi 0, %s140
      %s141 = sphi 0, %s138
      %s142 = sphi 0, %s141
      %s158 = sphi 0, %s142
      %s162 = sphi 0, %s162
      %s164 = sphi 0, %s162
      %s165 = sphi 0, %s164
      %s179 = sphi 0, %s165
      %s183 = sphi 0, %s183
      %s185 = sphi 0, %s183
      %s186 = sphi 0, %s185
      %s200 = sphi 0, %s186
      %s208 = sphi 0, %s210
      %s211 = sphi 0, %s208
      %s212 = sphi 0, %s211
      %s228 = sphi 0, %s212
      %s232 = sphi 0, %s232
      %s234 = sphi 0, %s232
      %s235 = sphi 0, %s234
      %s249 = sphi 0, %s235
      %s253 = sphi 0, %s253
      %s255 = sphi 0, %s253
      %s256 = sphi 0, %s255
      %s270 = sphi 0, %s256
      %s274 = sphi 0, %s274
      %s276 = sphi 0, %s274
      %s277 = sphi 0, %s276
      %s291 = sphi 0, %s277
      %s295 = sphi 0, %s295
      %s297 = sphi 0, %s295
      %s298 = sphi 0, %s297
      %s312 = sphi 0, %s298
      %s316 = sphi 0, %s316
      %s318 = sphi 0, %s316
      %s319 = sphi 0, %s318
      %s333 = sphi 0, %s319
      %s337 = sphi 0, %s337
      %s339 = sphi 0, %s337
      %s340 = sphi 0, %s339
      %s354 = sphi 0, %s340
      %s358 = sphi 0, %s358
      %s360 = sphi 0, %s358
      %s361 = sphi 0, %s360
      %s375 = sphi 0, %s361
      %s383 = sphi 0, %s385
      %s386 = sphi 0, %s383
      %s387 = sphi 0, %s386
      %s403 = sphi 0, %s387
    $region4: #{transformer_layer.3} parent=1 // loop_header_branch
      %26 = sbr.rel (%p24) target = $region8
    $region5: #{transformer_layer.3} parent=1 // loop_body
      %s28 = ssub.s32 %s23, 1
      %s29 = ssub.s32 %s23, 2
      %s39 = sadd.s32 1, %s32
      %p40 = scmp.ge.s32.totalorder %s39, 1
      %s41 = scalar_select %p40, 0, %s39
      %s42 = sadd.s32 1, %s31
      %s43 = scalar_select %p40, %s42, %s31
      %p44 = scmp.ge.s32.totalorder %s43, 1
      %s45 = scalar_select %p44, 0, %s43
      %s46 = sadd.s32 1, %s30
      %s47 = scalar_select %p44, %s46, %s30
      %p48 = scmp.ge.s32.totalorder %s47, 2
      %s49 = scalar_select %p48, 0, %s47
      %s50 = ssub.s32 %s30, %s49
      %s51 = ssub.s32 %s31, %s45
      %s52 = sor.u32 %s50, %s51
      %p53 = scmp.eq.s32.totalorder %s52, 0
      %s55 = sadd.s32 %s54, 1
      %s56 = scalar_select %p53, %s54, %s55
      %p59 = pneg %p53
      %p60 = scmp.eq.s32.totalorder %s23, 1
      %p61 = por %p59, %p60
      %p62 = scmp.ne.s32.totalorder %s54, %s57
      %p63 = scmp.eq.s32.totalorder %s23, 0
      %p64 = por %p62, %p63
      %p65 = scmp.ne.s32.totalorder %s54, %s57
      %p66 = scmp.eq.s32.totalorder %s28, 1
      %p67 = por %p65, %p66
      %p68 = scmp.ne.s32.totalorder %s57, %s58
      %p69 = scmp.eq.s32.totalorder %s28, 0
      %p70 = por %p68, %p69
      %p71 = scmp.ne.s32.totalorder %s57, %s58
      %p72 = scmp.eq.s32.totalorder %s29, 1
      %p73 = por %p71, %p72
      %p75 = scmp.ne.s32.totalorder %s58, %s74
      %p76 = scmp.eq.s32.totalorder %s29, 0
      %p77 = por %p75, %p76
      %s78 = ssub.s32 %s30, %s49
      %s79 = ssub.s32 %s32, %s41
      %s80 = sor.u32 %s78, %s79
      %p81 = scmp.eq.s32.totalorder %s80, 0
      %s83 = sadd.s32 %s82, 1
      %s84 = scalar_select %p81, %s82, %s83
      %p87 = pneg %p81
      %p88 = scmp.eq.s32.totalorder %s23, 1
      %p89 = por %p87, %p88
      %p90 = scmp.ne.s32.totalorder %s82, %s85
      %p91 = scmp.eq.s32.totalorder %s23, 0
      %p92 = por %p90, %p91
      %p93 = scmp.ne.s32.totalorder %s82, %s85
      %p94 = scmp.eq.s32.totalorder %s28, 1
      %p95 = por %p93, %p94
      %p96 = scmp.ne.s32.totalorder %s85, %s86
      %p97 = scmp.eq.s32.totalorder %s28, 0
      %p98 = por %p96, %p97
      %p99 = scmp.ne.s32.totalorder %s85, %s86
      %p100 = scmp.eq.s32.totalorder %s29, 1
      %p101 = por %p99, %p100
      %p103 = scmp.ne.s32.totalorder %s86, %s102
      %p104 = scmp.eq.s32.totalorder %s29, 0
      %p105 = por %p103, %p104
      %s106 = ssub.s32 %s30, %s49
      %s107 = ssub.s32 %s32, %s41
      %s108 = sor.u32 %s106, %s107
      %p109 = scmp.eq.s32.totalorder %s108, 0
      %s111 = sadd.s32 %s110, 1
      %s112 = scalar_select %p109, %s110, %s111
      %p115 = pneg %p109
      %p116 = scmp.eq.s32.totalorder %s23, 1
      %p117 = por %p115, %p116
      %p118 = scmp.ne.s32.totalorder %s110, %s113
      %p119 = scmp.eq.s32.totalorder %s23, 0
      %p120 = por %p118, %p119
      %p121 = scmp.ne.s32.totalorder %s110, %s113
      %p122 = scmp.eq.s32.totalorder %s28, 1
      %p123 = por %p121, %p122
      %p124 = scmp.ne.s32.totalorder %s113, %s114
      %p125 = scmp.eq.s32.totalorder %s28, 0
      %p126 = por %p124, %p125
      %p127 = scmp.ne.s32.totalorder %s113, %s114
      %p128 = scmp.eq.s32.totalorder %s29, 1
      %p129 = por %p127, %p128
      %p131 = scmp.ne.s32.totalorder %s114, %s130
      %p132 = scmp.eq.s32.totalorder %s29, 0
      %p133 = por %p131, %p132
      %s134 = ssub.s32 %s31, %s45
      %s135 = ssub.s32 %s32, %s41
      %s136 = sor.u32 %s134, %s135
      %p137 = scmp.eq.s32.totalorder %s136, 0
      %s139 = sadd.s32 %s138, 1
      %s140 = scalar_select %p137, %s138, %s139
      %p143 = pneg %p137
      %p144 = scmp.eq.s32.totalorder %s23, 1
      %p145 = por %p143, %p144
      %p146 = scmp.ne.s32.totalorder %s138, %s141
      %p147 = scmp.eq.s32.totalorder %s23, 0
      %p148 = por %p146, %p147
      %p149 = scmp.ne.s32.totalorder %s138, %s141
      %p150 = scmp.eq.s32.totalorder %s28, 1
      %p151 = por %p149, %p150
      %p152 = scmp.ne.s32.totalorder %s141, %s142
      %p153 = scmp.eq.s32.totalorder %s28, 0
      %p154 = por %p152, %p153
      %p155 = scmp.ne.s32.totalorder %s141, %s142
      %p156 = scmp.eq.s32.totalorder %s29, 1
      %p157 = por %p155, %p156
      %p159 = scmp.ne.s32.totalorder %s142, %s158
      %p160 = scmp.eq.s32.totalorder %s29, 0
      %p161 = por %p159, %p160
      %s163 = sadd.s32 %s162, 1
      %p166 = scmp.eq.s32.totalorder %s23, 1
      %p167 = scmp.ne.s32.totalorder %s162, %s164
      %p168 = scmp.eq.s32.totalorder %s23, 0
      %p169 = por %p167, %p168
      %p170 = scmp.ne.s32.totalorder %s162, %s164
      %p171 = scmp.eq.s32.totalorder %s28, 1
      %p172 = por %p170, %p171
      %p173 = scmp.ne.s32.totalorder %s164, %s165
      %p174 = scmp.eq.s32.totalorder %s28, 0
      %p175 = por %p173, %p174
      %p176 = scmp.ne.s32.totalorder %s164, %s165
      %p177 = scmp.eq.s32.totalorder %s29, 1
      %p178 = por %p176, %p177
      %p180 = scmp.ne.s32.totalorder %s165, %s179
      %p181 = scmp.eq.s32.totalorder %s29, 0
      %p182 = por %p180, %p181
      %s184 = sadd.s32 %s183, 1
      %p187 = scmp.eq.s32.totalorder %s23, 1
      %p188 = scmp.ne.s32.totalorder %s183, %s185
      %p189 = scmp.eq.s32.totalorder %s23, 0
      %p190 = por %p188, %p189
      %p191 = scmp.ne.s32.totalorder %s183, %s185
      %p192 = scmp.eq.s32.totalorder %s28, 1
      %p193 = por %p191, %p192
      %p194 = scmp.ne.s32.totalorder %s185, %s186
      %p195 = scmp.eq.s32.totalorder %s28, 0
      %p196 = por %p194, %p195
      %p197 = scmp.ne.s32.totalorder %s185, %s186
      %p198 = scmp.eq.s32.totalorder %s29, 1
      %p199 = por %p197, %p198
      %p201 = scmp.ne.s32.totalorder %s186, %s200
      %p202 = scmp.eq.s32.totalorder %s29, 0
      %p203 = por %p201, %p202
      %s204 = ssub.s32 %s30, %s49
      %s205 = ssub.s32 %s31, %s45
      %s206 = sor.u32 %s204, %s205
      %p207 = scmp.eq.s32.totalorder %s206, 0
      %s209 = sadd.s32 %s208, 1
      %s210 = scalar_select %p207, %s208, %s209
      %p213 = pneg %p207
      %p214 = scmp.eq.s32.totalorder %s23, 1
      %p215 = por %p213, %p214
      %p216 = scmp.ne.s32.totalorder %s208, %s211
      %p217 = scmp.eq.s32.totalorder %s23, 0
      %p218 = por %p216, %p217
      %p219 = scmp.ne.s32.totalorder %s208, %s211
      %p220 = scmp.eq.s32.totalorder %s28, 1
      %p221 = por %p219, %p220
      %p222 = scmp.ne.s32.totalorder %s211, %s212
      %p223 = scmp.eq.s32.totalorder %s28, 0
      %p224 = por %p222, %p223
      %p225 = scmp.ne.s32.totalorder %s211, %s212
      %p226 = scmp.eq.s32.totalorder %s29, 1
      %p227 = por %p225, %p226
      %p229 = scmp.ne.s32.totalorder %s212, %s228
      %p230 = scmp.eq.s32.totalorder %s29, 0
      %p231 = por %p229, %p230
      %s233 = sadd.s32 %s232, 1
      %p236 = scmp.eq.s32.totalorder %s23, 1
      %p237 = scmp.ne.s32.totalorder %s232, %s234
      %p238 = scmp.eq.s32.totalorder %s23, 0
      %p239 = por %p237, %p238
      %p240 = scmp.ne.s32.totalorder %s232, %s234
      %p241 = scmp.eq.s32.totalorder %s28, 1
      %p242 = por %p240, %p241
      %p243 = scmp.ne.s32.totalorder %s234, %s235
      %p244 = scmp.eq.s32.totalorder %s28, 0
      %p245 = por %p243, %p244
      %p246 = scmp.ne.s32.totalorder %s234, %s235
      %p247 = scmp.eq.s32.totalorder %s29, 1
      %p248 = por %p246, %p247
      %p250 = scmp.ne.s32.totalorder %s235, %s249
      %p251 = scmp.eq.s32.totalorder %s29, 0
      %p252 = por %p250, %p251
      %s254 = sadd.s32 %s253, 1
      %p257 = scmp.eq.s32.totalorder %s23, 1
      %p258 = scmp.ne.s32.totalorder %s253, %s255
      %p259 = scmp.eq.s32.totalorder %s23, 0
      %p260 = por %p258, %p259
      %p261 = scmp.ne.s32.totalorder %s253, %s255
      %p262 = scmp.eq.s32.totalorder %s28, 1
      %p263 = por %p261, %p262
      %p264 = scmp.ne.s32.totalorder %s255, %s256
      %p265 = scmp.eq.s32.totalorder %s28, 0
      %p266 = por %p264, %p265
      %p267 = scmp.ne.s32.totalorder %s255, %s256
      %p268 = scmp.eq.s32.totalorder %s29, 1
      %p269 = por %p267, %p268
      %p271 = scmp.ne.s32.totalorder %s256, %s270
      %p272 = scmp.eq.s32.totalorder %s29, 0
      %p273 = por %p271, %p272
      %s275 = sadd.s32 %s274, 1
      %p278 = scmp.eq.s32.totalorder %s23, 1
      %p279 = scmp.ne.s32.totalorder %s274, %s276
      %p280 = scmp.eq.s32.totalorder %s23, 0
      %p281 = por %p279, %p280
      %p282 = scmp.ne.s32.totalorder %s274, %s276
      %p283 = scmp.eq.s32.totalorder %s28, 1
      %p284 = por %p282, %p283
      %p285 = scmp.ne.s32.totalorder %s276, %s277
      %p286 = scmp.eq.s32.totalorder %s28, 0
      %p287 = por %p285, %p286
      %p288 = scmp.ne.s32.totalorder %s276, %s277
      %p289 = scmp.eq.s32.totalorder %s29, 1
      %p290 = por %p288, %p289
      %p292 = scmp.ne.s32.totalorder %s277, %s291
      %p293 = scmp.eq.s32.totalorder %s29, 0
      %p294 = por %p292, %p293
      %s296 = sadd.s32 %s295, 1
      %p299 = scmp.eq.s32.totalorder %s23, 1
      %p300 = scmp.ne.s32.totalorder %s295, %s297
      %p301 = scmp.eq.s32.totalorder %s23, 0
      %p302 = por %p300, %p301
      %p303 = scmp.ne.s32.totalorder %s295, %s297
      %p304 = scmp.eq.s32.totalorder %s28, 1
      %p305 = por %p303, %p304
      %p306 = scmp.ne.s32.totalorder %s297, %s298
      %p307 = scmp.eq.s32.totalorder %s28, 0
      %p308 = por %p306, %p307
      %p309 = scmp.ne.s32.totalorder %s297, %s298
      %p310 = scmp.eq.s32.totalorder %s29, 1
      %p311 = por %p309, %p310
      %p313 = scmp.ne.s32.totalorder %s298, %s312
      %p314 = scmp.eq.s32.totalorder %s29, 0
      %p315 = por %p313, %p314
      %s317 = sadd.s32 %s316, 1
      %p320 = scmp.eq.s32.totalorder %s23, 1
      %p321 = scmp.ne.s32.totalorder %s316, %s318
      %p322 = scmp.eq.s32.totalorder %s23, 0
      %p323 = por %p321, %p322
      %p324 = scmp.ne.s32.totalorder %s316, %s318
      %p325 = scmp.eq.s32.totalorder %s28, 1
      %p326 = por %p324, %p325
      %p327 = scmp.ne.s32.totalorder %s318, %s319
      %p328 = scmp.eq.s32.totalorder %s28, 0
      %p329 = por %p327, %p328
      %p330 = scmp.ne.s32.totalorder %s318, %s319
      %p331 = scmp.eq.s32.totalorder %s29, 1
      %p332 = por %p330, %p331
      %p334 = scmp.ne.s32.totalorder %s319, %s333
      %p335 = scmp.eq.s32.totalorder %s29, 0
      %p336 = por %p334, %p335
      %s338 = sadd.s32 %s337, 1
      %p341 = scmp.eq.s32.totalorder %s23, 1
      %p342 = scmp.ne.s32.totalorder %s337, %s339
      %p343 = scmp.eq.s32.totalorder %s23, 0
      %p344 = por %p342, %p343
      %p345 = scmp.ne.s32.totalorder %s337, %s339
      %p346 = scmp.eq.s32.totalorder %s28, 1
      %p347 = por %p345, %p346
      %p348 = scmp.ne.s32.totalorder %s339, %s340
      %p349 = scmp.eq.s32.totalorder %s28, 0
      %p350 = por %p348, %p349
      %p351 = scmp.ne.s32.totalorder %s339, %s340
      %p352 = scmp.eq.s32.totalorder %s29, 1
      %p353 = por %p351, %p352
      %p355 = scmp.ne.s32.totalorder %s340, %s354
      %p356 = scmp.eq.s32.totalorder %s29, 0
      %p357 = por %p355, %p356
      %s359 = sadd.s32 %s358, 1
      %p362 = scmp.eq.s32.totalorder %s23, 1
      %p363 = scmp.ne.s32.totalorder %s358, %s360
      %p364 = scmp.eq.s32.totalorder %s23, 0
      %p365 = por %p363, %p364
      %p366 = scmp.ne.s32.totalorder %s358, %s360
      %p367 = scmp.eq.s32.totalorder %s28, 1
      %p368 = por %p366, %p367
      %p369 = scmp.ne.s32.totalorder %s360, %s361
      %p370 = scmp.eq.s32.totalorder %s28, 0
      %p371 = por %p369, %p370
      %p372 = scmp.ne.s32.totalorder %s360, %s361
      %p373 = scmp.eq.s32.totalorder %s29, 1
      %p374 = por %p372, %p373
      %p376 = scmp.ne.s32.totalorder %s361, %s375
      %p377 = scmp.eq.s32.totalorder %s29, 0
      %p378 = por %p376, %p377
      %s379 = ssub.s32 %s30, %s49
      %s380 = ssub.s32 %s31, %s45
      %s381 = sor.u32 %s379, %s380
      %p382 = scmp.eq.s32.totalorder %s381, 0
      %s384 = sadd.s32 %s383, 1
      %s385 = scalar_select %p382, %s383, %s384
      %p388 = pneg %p382
      %p389 = scmp.eq.s32.totalorder %s23, 1
      %p390 = por %p388, %p389
      %p391 = scmp.ne.s32.totalorder %s383, %s386
      %p392 = scmp.eq.s32.totalorder %s23, 0
      %p393 = por %p391, %p392
      %p394 = scmp.ne.s32.totalorder %s383, %s386
      %p395 = scmp.eq.s32.totalorder %s28, 1
      %p396 = por %p394, %p395
      %p397 = scmp.ne.s32.totalorder %s386, %s387
      %p398 = scmp.eq.s32.totalorder %s28, 0
      %p399 = por %p397, %p398
      %p400 = scmp.ne.s32.totalorder %s386, %s387
      %p401 = scmp.eq.s32.totalorder %s29, 1
      %p402 = por %p400, %p401
      %p404 = scmp.ne.s32.totalorder %s387, %s403
      %p405 = scmp.eq.s32.totalorder %s29, 0
      %p406 = por %p404, %p405
      %p407 = scmp.le.s32.totalorder 1, %s23
      %p408 = scmp.lt.s32.totalorder %s23, 3
      %p409 = pnand %p407, %p408
      %p410 = pneg %p409
      // Predicated region
      $region9: #{transformer_layer.3} parent=5 // pred_check
        _
      $region10: #{transformer_layer.3} parent=5 // pred_check_branch
        %412 = sbr.rel (%p409) target = $region12
      $region11: #{transformer_layer.3} parent=5 // pred_region
        %s413 = ssub.s32 %s23, 1
        // Predicated region
        $region13: #{transformer_layer.3} parent=11 // pred_check
          %p414 = pneg %p154
        $region14: #{transformer_layer.3} parent=11 // pred_check_branch
          %416 = sbr.rel (%p414) target = $region16
        $region15: #{transformer_layer.3} parent=11 // pred_region
          %p417 = scmp.lt.s32.totalorder %s34, 0
          %s418 = scalar_select %p417, %s34, 0
          %p419 = scmp.lt.s32.totalorder %s35, 0
          %s420 = scalar_select %p419, %s35, 0
          %s421 = sadd.s32 %s420, %s418
          %s422 = smul.addr %s421, 8
          %s423 = scalar_lea.vmem %s3, %s422
        $region16: #{transformer_layer.3} parent=11 // pred_fallthru
          _
        // Predicated region
        $region17: #{transformer_layer.3} parent=11 // pred_check
          %p424 = pneg %p175
        $region18: #{transformer_layer.3} parent=11 // pred_check_branch
          %426 = sbr.rel (%p424) target = $region20
        $region19: #{transformer_layer.3} parent=11 // pred_region
          _
        $region20: #{transformer_layer.3} parent=11 // pred_fallthru
          _
        // Predicated region
        $region21: #{transformer_layer.3} parent=11 // pred_check
          %p427 = pneg %p196
        $region22: #{transformer_layer.3} parent=11 // pred_check_branch
          %429 = sbr.rel (%p427) target = $region24
        $region23: #{transformer_layer.3} parent=11 // pred_region
          _
        $region24: #{transformer_layer.3} parent=11 // pred_fallthru
          _
        // Predicated region
        $region25: #{transformer_layer.3} parent=11 // pred_check
          %p430 = pneg %p245
        $region26: #{transformer_layer.3} parent=11 // pred_check_branch
          %432 = sbr.rel (%p430) target = $region28
        $region27: #{transformer_layer.3} parent=11 // pred_region
          _
        $region28: #{transformer_layer.3} parent=11 // pred_fallthru
          _
        // Predicated region
        $region29: #{transformer_layer.3} parent=11 // pred_check
          %p433 = pneg %p266
        $region30: #{transformer_layer.3} parent=11 // pred_check_branch
          %435 = sbr.rel (%p433) target = $region32
        $region31: #{transformer_layer.3} parent=11 // pred_region
          _
        $region32: #{transformer_layer.3} parent=11 // pred_fallthru
          _
        // Predicated region
        $region33: #{transformer_layer.3} parent=11 // pred_check
          %p436 = pneg %p287
        $region34: #{transformer_layer.3} parent=11 // pred_check_branch
          %438 = sbr.rel (%p436) target = $region36
        $region35: #{transformer_layer.3} parent=11 // pred_region
          _
        $region36: #{transformer_layer.3} parent=11 // pred_fallthru
          _
        // Predicated region
        $region37: #{transformer_layer.3} parent=11 // pred_check
          %p439 = pneg %p308
        $region38: #{transformer_layer.3} parent=11 // pred_check_branch
          %441 = sbr.rel (%p439) target = $region40
        $region39: #{transformer_layer.3} parent=11 // pred_region
          _
        $region40: #{transformer_layer.3} parent=11 // pred_fallthru
          _
        // Predicated region
        $region41: #{transformer_layer.3} parent=11 // pred_check
          %p442 = pneg %p329
        $region42: #{transformer_layer.3} parent=11 // pred_check_branch
          %444 = sbr.rel (%p442) target = $region44
        $region43: #{transformer_layer.3} parent=11 // pred_region
          _
        $region44: #{transformer_layer.3} parent=11 // pred_fallthru
          _
        // Predicated region
        $region45: #{transformer_layer.3} parent=11 // pred_check
          %p445 = pneg %p350
        $region46: #{transformer_layer.3} parent=11 // pred_check_branch
          %447 = sbr.rel (%p445) target = $region48
        $region47: #{transformer_layer.3} parent=11 // pred_region
          _
        $region48: #{transformer_layer.3} parent=11 // pred_fallthru
          _
        // Predicated region
        $region49: #{transformer_layer.3} parent=11 // pred_check
          %p448 = pneg %p371
        $region50: #{transformer_layer.3} parent=11 // pred_check_branch
          %450 = sbr.rel (%p448) target = $region52
        $region51: #{transformer_layer.3} parent=11 // pred_region
          _
        $region52: #{transformer_layer.3} parent=11 // pred_fallthru
          _
      $region12: #{transformer_layer.3} parent=5 // pred_fallthru
        _
      %p451 = scmp.lt.s32.totalorder %s23, 2
      // Predicated region
      $region53: #{transformer_layer.3} parent=5 // pred_check
        %p452 = pneg %p451
      $region54: #{transformer_layer.3} parent=5 // pred_check_branch
        %454 = sbr.rel (%p452) target = $region56
      $region55: #{transformer_layer.3} parent=5 // pred_region
        // Predicated region
        $region57: #{transformer_layer.3} parent=55 // pred_check
          %p455 = pneg %p64
        $region58: #{transformer_layer.3} parent=55 // pred_check_branch
          %457 = sbr.rel (%p455) target = $region60
        $region59: #{transformer_layer.3} parent=55 // pred_region
          %p458 = scmp.lt.s32.totalorder %s30, 1
          %s459 = scalar_select %p458, %s30, 1
          %p460 = scmp.lt.s32.totalorder %s31, 0
          %s461 = scalar_select %p460, %s31, 0
          %s462 = smul.addr %s459, 4
          %s463 = sadd.s32 %s461, %s462
          %s464 = smul.addr %s463, 4
          %s465 = scalar_lea.vmem %s0, %s464
        $region60: #{transformer_layer.3} parent=55 // pred_fallthru
          _
        // Predicated region
        $region61: #{transformer_layer.3} parent=55 // pred_check
          %p466 = pneg %p92
        $region62: #{transformer_layer.3} parent=55 // pred_check_branch
          %468 = sbr.rel (%p466) target = $region64
        $region63: #{transformer_layer.3} parent=55 // pred_region
          %p469 = scmp.lt.s32.totalorder %s30, 1
          %s470 = scalar_select %p469, %s30, 1
          %p471 = scmp.lt.s32.totalorder %s32, 0
          %s472 = scalar_select %p471, %s32, 0
          %s473 = smul.addr %s470, 4
          %s474 = sadd.s32 %s472, %s473
          %s475 = smul.addr %s474, 4
          %s476 = scalar_lea.vmem %s1, %s475
        $region64: #{transformer_layer.3} parent=55 // pred_fallthru
          _
        // Predicated region
        $region65: #{transformer_layer.3} parent=55 // pred_check
          %p477 = pneg %p120
        $region66: #{transformer_layer.3} parent=55 // pred_check_branch
          %479 = sbr.rel (%p477) target = $region68
        $region67: #{transformer_layer.3} parent=55 // pred_region
          %p480 = scmp.lt.s32.totalorder %s30, 1
          %s481 = scalar_select %p480, %s30, 1
          %p482 = scmp.lt.s32.totalorder %s32, 0
          %s483 = scalar_select %p482, %s32, 0
          %s484 = smul.addr %s481, 4
          %s485 = sadd.s32 %s483, %s484
          %s486 = smul.addr %s485, 4
          %s487 = scalar_lea.vmem %s2, %s486
        $region68: #{transformer_layer.3} parent=55 // pred_fallthru
          _
        // Predicated region
        $region69: #{transformer_layer.3} parent=55 // pred_check
          %p488 = pneg %p218
        $region70: #{transformer_layer.3} parent=55 // pred_check_branch
          %490 = sbr.rel (%p488) target = $region72
        $region71: #{transformer_layer.3} parent=55 // pred_region
          %p491 = scmp.lt.s32.totalorder %s30, 1
          %s492 = scalar_select %p491, %s30, 1
          %p493 = scmp.lt.s32.totalorder %s31, 0
          %s494 = scalar_select %p493, %s31, 0
          %s495 = sadd.s32 %s494, %s492
          %s496 = smul.addr %s495, 8
          %s497 = scalar_lea.vmem %s6, %s496
        $region72: #{transformer_layer.3} parent=55 // pred_fallthru
          _
      $region56: #{transformer_layer.3} parent=5 // pred_fallthru
        _
      %p498 = scmp.le.s32.totalorder 1, %s23
      %p499 = scmp.lt.s32.totalorder %s23, 3
      %p500 = pnand %p498, %p499
      %p501 = pneg %p500
      // Predicated region
      $region73: #{transformer_layer.3} parent=5 // pred_check
        _
      $region74: #{transformer_layer.3} parent=5 // pred_check_branch
        %503 = sbr.rel (%p500) target = $region76
      $region75: #{transformer_layer.3} parent=5 // pred_region
        %s504 = ssub.s32 %s23, 1
        %p505 = scmp.lt.s32.totalorder %s33, 1
        %s506 = scalar_select %p505, %s33, 1
        %p507 = scmp.lt.s32.totalorder %s34, 0
        %s508 = scalar_select %p507, %s34, 0
        %s509 = smul.addr %s506, 4
        %s510 = sadd.s32 %s508, %s509
        %s511 = smul.addr %s510, 4
        %s512 = scalar_lea.vmem %s0, %s511
        %p513 = pneg %p70
        %p514 = pneg %p67
        %p515 = scmp.lt.s32.totalorder %s33, 1
        %s516 = scalar_select %p515, %s33, 1
        %p517 = scmp.lt.s32.totalorder %s35, 0
        %s518 = scalar_select %p517, %s35, 0
        %s519 = smul.addr %s516, 4
        %s520 = sadd.s32 %s518, %s519
        %s521 = smul.addr %s520, 4
        %s522 = scalar_lea.vmem %s1, %s521
        %p523 = pneg %p98
        %p524 = pneg %p95
        %p525 = scmp.lt.s32.totalorder %s33, 1
        %s526 = scalar_select %p525, %s33, 1
        %p527 = scmp.lt.s32.totalorder %s35, 0
        %s528 = scalar_select %p527, %s35, 0
        %s529 = smul.addr %s526, 4
        %s530 = sadd.s32 %s528, %s529
        %s531 = smul.addr %s530, 4
        %s532 = scalar_lea.vmem %s2, %s531
        %p533 = pneg %p126
        %p534 = pneg %p123
        %p535 = scmp.lt.s32.totalorder %s34, 0
        %s536 = scalar_select %p535, %s34, 0
        %p537 = scmp.lt.s32.totalorder %s35, 0
        %s538 = scalar_select %p537, %s35, 0
        %s539 = sadd.s32 %s538, %s536
        %s540 = smul.addr %s539, 8
        %s541 = scalar_lea.vmem %s3, %s540
        %p542 = pneg %p154
        %p543 = pneg %p151
        %p544 = pneg %p175
        %p545 = pneg %p172
        %p546 = pneg %p196
        %p547 = pneg %p193
        %p548 = scmp.lt.s32.totalorder %s33, 1
        %s549 = scalar_select %p548, %s33, 1
        %p550 = scmp.lt.s32.totalorder %s34, 0
        %s551 = scalar_select %p550, %s34, 0
        %s552 = sadd.s32 %s551, %s549
        %s553 = smul.addr %s552, 8
        %s554 = scalar_lea.vmem %s6, %s553
        %p555 = pneg %p224
        %p556 = pneg %p221
        %p557 = pneg %p245
        %p558 = pneg %p242
        %p559 = pneg %p266
        %p560 = pneg %p263
        %p561 = pneg %p287
        %p562 = pneg %p284
        %p563 = pneg %p308
        %p564 = pneg %p305
        %p565 = pneg %p329
        %p566 = pneg %p326
        %p567 = pneg %p350
        %p568 = pneg %p347
        %p569 = pneg %p371
        %p570 = pneg %p368
        %p571 = pneg %p399
        %p572 = pneg %p396
        %s573 = sand.u32 %s386, 1
        %s574 = scalar_lea.sflag [#allocation6], %s573
        %s575 = sand.u32 %s386, 1
        %s576 = smul.addr %s575, 8
        %s577 = scalar_lea.vmem [#allocation5], %s576
        %p578 = scmp.lt.s32.totalorder %s33, 1
        %s579 = scalar_select %p578, %s33, 1
        %p580 = scmp.lt.s32.totalorder %s34, 0
        %s581 = scalar_select %p580, %s34, 0
        %s582 = smul.addr %s579, 4
        %s583 = sadd.s32 %s581, %s582
        %s584 = smul.addr %s583, 4
        %s585 = scalar_lea.vmem %s0, %s584
        %p586 = scmp.lt.s32.totalorder %s33, 1
        %s587 = scalar_select %p586, %s33, 1
        %p588 = scmp.lt.s32.totalorder %s35, 0
        %s589 = scalar_select %p588, %s35, 0
        %s590 = smul.addr %s587, 4
        %s591 = sadd.s32 %s589, %s590
        %s592 = smul.addr %s591, 4
        %s593 = scalar_lea.vmem %s1, %s592
        %p594 = scmp.lt.s32.totalorder %s33, 1
        %s595 = scalar_select %p594, %s33, 1
        %p596 = scmp.lt.s32.totalorder %s35, 0
        %s597 = scalar_select %p596, %s35, 0
        %s598 = smul.addr %s595, 4
        %s599 = sadd.s32 %s597, %s598
        %s600 = smul.addr %s599, 4
        %s601 = scalar_lea.vmem %s2, %s600
        %p602 = scmp.lt.s32.totalorder %s34, 0
        %s603 = scalar_select %p602, %s34, 0
        %p604 = scmp.lt.s32.totalorder %s35, 0
        %s605 = scalar_select %p604, %s35, 0
        %s606 = sadd.s32 %s605, %s603
        %s607 = smul.addr %s606, 8
        %s608 = scalar_lea.vmem %s3, %s607
        %p609 = scmp.lt.s32.totalorder %s33, 1
        %s610 = scalar_select %p609, %s33, 1
        %p611 = scmp.lt.s32.totalorder %s34, 0
        %s612 = scalar_select %p611, %s34, 0
        %s613 = sadd.s32 %s612, %s610
        %s614 = smul.addr %s613, 8
        %s615 = scalar_lea.vmem %s6, %s614
        %p617 = scmp.eq.s32.totalorder %s35, 0
        // Predicated region
        $region77: #{transformer_layer.3} parent=75 // pred_check
          %p618 = pneg %p617
        $region78: #{transformer_layer.3} parent=75 // pred_check_branch
          %620 = sbr.rel (%p618) target = $region80
        $region79: #{transformer_layer.3} parent=75 // pred_region
          %vm621 = vcmask 7168
          %622 = vst.msk [vmem:[#allocation2] sm:$0xff] %vm621, -1e+30
          %623 = vst.msk [vmem:[#allocation2 + $0x8] sm:$0xff] %vm621, -1e+30
          %624 = vst.msk [vmem:[#allocation2 + $0x10] sm:$0xff] %vm621, -1e+30
          %625 = vst.msk [vmem:[#allocation2 + $0x18] sm:$0xff] %vm621, -1e+30
          %626 = vst.msk [vmem:[#allocation3] sm:$0xff] %vm621, 0.0
          %627 = vst.msk [vmem:[#allocation3 + $0x8] sm:$0xff] %vm621, 0.0
          %628 = vst.msk [vmem:[#allocation3 + $0x10] sm:$0xff] %vm621, 0.0
          %629 = vst.msk [vmem:[#allocation3 + $0x18] sm:$0xff] %vm621, 0.0
          %vm630 = vcmask 64512
          %631 = vst.msk [vmem:[#allocation4] sm:$0xff] %vm630, 0.0
          %632 = vst.msk [vmem:[#allocation4 + $0x8] sm:$0xff] %vm630, 0.0
          %633 = vst.msk [vmem:[#allocation4 + $0x10] sm:$0xff] %vm630, 0.0
          %634 = vst.msk [vmem:[#allocation4 + $0x18] sm:$0xff] %vm630, 0.0
        $region80: #{transformer_layer.3} parent=75 // pred_fallthru
          _
        %v635 = vld [vmem:[%s4] sm:$0x1]
        %v636 = vld [vmem:[%s4 + $0x1] sm:$0x1]
        %v637 = vld [vmem:[%s4 + $0x2] sm:$0x1]
        %v638 = vld [vmem:[%s4 + $0x3] sm:$0x1]
        %v639 = vld [vmem:[%s5] sm:$0x1]
        %v640 = vld [vmem:[%s5 + $0x1] sm:$0x1]
        %v641 = vld [vmem:[%s5 + $0x2] sm:$0x1]
        %v642 = vld [vmem:[%s5 + $0x3] sm:$0x1]
        %v643 = vld [vmem:[%s585] sm:$0xf]
        %v644 = vld [vmem:[%s585 + $0x4] sm:$0xf]
        %v645 = vld [vmem:[%s585 + $0x8] sm:$0xf]
        %v646 = vld [vmem:[%s585 + $0xc] sm:$0xf]
        %v647 = vunpack.c.l.bf16 %v643
        %v648 = vunpack.c.l.bf16 %v644
        %v649 = vunpack.c.l.bf16 %v645
        %v650 = vunpack.c.l.bf16 %v646
        %v655 = vlaneseq
        %v656 = vshrl.u32 %v655, 7
        %v657 = vsub.s32 0, %v656
        %v658 = vrot.slane %v635, %v657
        %v659 = vlaneseq
        %v660 = vshrl.u32 %v659, 7
        %v661 = vsub.s32 0, %v660
        %v662 = vrot.slane %v636, %v661
        %v663 = vlaneseq
        %v664 = vshrl.u32 %v663, 7
        %v665 = vsub.s32 0, %v664
        %v666 = vrot.slane %v637, %v665
        %v667 = vlaneseq
        %v668 = vshrl.u32 %v667, 7
        %v669 = vsub.s32 0, %v668
        %v670 = vrot.slane %v638, %v669
        %v675 = vmul.f32 %v647, %v658
        %v676 = vmul.f32 %v648, %v662
        %v677 = vmul.f32 %v649, %v666
        %v678 = vmul.f32 %v650, %v670
        %v683 = vlaneseq
        %v684 = vshrl.u32 %v683, 7
        %v685 = vsub.s32 0, %v684
        %v686 = vrot.slane %v639, %v685
        %v687 = vlaneseq
        %v688 = vshrl.u32 %v687, 7
        %v689 = vsub.s32 0, %v688
        %v690 = vrot.slane %v640, %v689
        %v691 = vlaneseq
        %v692 = vshrl.u32 %v691, 7
        %v693 = vsub.s32 0, %v692
        %v694 = vrot.slane %v641, %v693
        %v695 = vlaneseq
        %v696 = vshrl.u32 %v695, 7
        %v697 = vsub.s32 0, %v696
        %v698 = vrot.slane %v642, %v697
        %699 = vrot.lane.b32.xlu0 %v686, 4
        %v700 = vpop.permute.xlu0 %699
        %701 = vrot.lane.b32.xlu0 %v690, 4
        %v702 = vpop.permute.xlu0 %701
        %703 = vrot.lane.b32.xlu0 %v694, 4
        %v704 = vpop.permute.xlu0 %703
        %705 = vrot.lane.b32.xlu0 %v698, 4
        %v706 = vpop.permute.xlu0 %705
        %v711 = vmul.f32 %v647, %v700
        %v712 = vmul.f32 %v648, %v702
        %v713 = vmul.f32 %v649, %v704
        %v714 = vmul.f32 %v650, %v706
        %719 = vrot.lane.b32.xlu0 %v711, 124
        %v720 = vpop.permute.xlu0 %719
        %721 = vrot.lane.b32.xlu0 %v712, 124
        %v722 = vpop.permute.xlu0 %721
        %723 = vrot.lane.b32.xlu0 %v713, 124
        %v724 = vpop.permute.xlu0 %723
        %725 = vrot.lane.b32.xlu0 %v714, 124
        %v726 = vpop.permute.xlu0 %725
        %v731 = vadd.f32 %v675, %v720
        %v732 = vadd.f32 %v676, %v722
        %v733 = vadd.f32 %v677, %v724
        %v734 = vadd.f32 %v678, %v726
        %735 = vrot.lane.b32.xlu0 %v686, 124
        %v736 = vpop.permute.xlu0 %735
        %737 = vrot.lane.b32.xlu0 %v690, 124
        %v738 = vpop.permute.xlu0 %737
        %739 = vrot.lane.b32.xlu0 %v694, 124
        %v740 = vpop.permute.xlu0 %739
        %741 = vrot.lane.b32.xlu0 %v698, 124
        %v742 = vpop.permute.xlu0 %741
        %v747 = vmul.f32 %v647, %v736
        %v748 = vmul.f32 %v648, %v738
        %v749 = vmul.f32 %v649, %v740
        %v750 = vmul.f32 %v650, %v742
        %755 = vrot.lane.b32.xlu0 %v747, 4
        %v756 = vpop.permute.xlu0 %755
        %757 = vrot.lane.b32.xlu0 %v748, 4
        %v758 = vpop.permute.xlu0 %757
        %759 = vrot.lane.b32.xlu0 %v749, 4
        %v760 = vpop.permute.xlu0 %759
        %761 = vrot.lane.b32.xlu0 %v750, 4
        %v762 = vpop.permute.xlu0 %761
        %v767 = vadd.f32 %v675, %v756
        %v768 = vadd.f32 %v676, %v758
        %v769 = vadd.f32 %v677, %v760
        %v770 = vadd.f32 %v678, %v762
        %vm771 = vcmask 31744
        %v772 = vsel %vm771, %v731, %v767
        %v773 = vsel %vm771, %v732, %v768
        %v774 = vsel %vm771, %v733, %v769
        %v775 = vsel %vm771, %v734, %v770
        %v776 = vmul.f32 %v772, 0.35355338
        %v777 = vmul.f32 %v773, 0.35355338
        %v778 = vmul.f32 %v774, 0.35355338
        %v779 = vmul.f32 %v775, 0.35355338
        %v780 = vpack.c.bf16 %v776, %v776
        %v781 = vpack.c.bf16 %v777, %v777
        %v782 = vpack.c.bf16 %v778, %v778
        %v783 = vpack.c.bf16 %v779, %v779
        %v784 = vld [vmem:[%s593] sm:$0xf]
        %v785 = vld [vmem:[%s593 + $0x4] sm:$0xf]
        %v786 = vld [vmem:[%s593 + $0x8] sm:$0xf]
        %v787 = vld [vmem:[%s593 + $0xc] sm:$0xf]
        %v788 = vunpack.c.l.bf16 %v784
        %v789 = vunpack.c.l.bf16 %v785
        %v790 = vunpack.c.l.bf16 %v786
        %v791 = vunpack.c.l.bf16 %v787
        %v792 = vmul.f32 %v788, %v658
        %v793 = vmul.f32 %v789, %v662
        %v794 = vmul.f32 %v790, %v666
        %v795 = vmul.f32 %v791, %v670
        %v796 = vmul.f32 %v788, %v700
        %v797 = vmul.f32 %v789, %v702
        %v798 = vmul.f32 %v790, %v704
        %v799 = vmul.f32 %v791, %v706
        %804 = vrot.lane.b32.xlu0 %v796, 124
        %v805 = vpop.permute.xlu0 %804
        %806 = vrot.lane.b32.xlu0 %v797, 124
        %v807 = vpop.permute.xlu0 %806
        %808 = vrot.lane.b32.xlu0 %v798, 124
        %v809 = vpop.permute.xlu0 %808
        %810 = vrot.lane.b32.xlu0 %v799, 124
        %v811 = vpop.permute.xlu0 %810
        %v816 = vadd.f32 %v792, %v805
        %v817 = vadd.f32 %v793, %v807
        %v818 = vadd.f32 %v794, %v809
        %v819 = vadd.f32 %v795, %v811
        %v820 = vmul.f32 %v788, %v736
        %v821 = vmul.f32 %v789, %v738
        %v822 = vmul.f32 %v790, %v740
        %v823 = vmul.f32 %v791, %v742
        %828 = vrot.lane.b32.xlu0 %v820, 4
        %v829 = vpop.permute.xlu0 %828
        %830 = vrot.lane.b32.xlu0 %v821, 4
        %v831 = vpop.permute.xlu0 %830
        %832 = vrot.lane.b32.xlu0 %v822, 4
        %v833 = vpop.permute.xlu0 %832
        %834 = vrot.lane.b32.xlu0 %v823, 4
        %v835 = vpop.permute.xlu0 %834
        %v840 = vadd.f32 %v792, %v829
        %v841 = vadd.f32 %v793, %v831
        %v842 = vadd.f32 %v794, %v833
        %v843 = vadd.f32 %v795, %v835
        %v844 = vsel %vm771, %v816, %v840
        %v845 = vsel %vm771, %v817, %v841
        %v846 = vsel %vm771, %v818, %v842
        %v847 = vsel %vm771, %v819, %v843
        %v848 = vpack.c.bf16 %v844, %v844
        %v849 = vpack.c.bf16 %v845, %v845
        %v850 = vpack.c.bf16 %v846, %v846
        %v851 = vpack.c.bf16 %v847, %v847
        %v852 = vld [vmem:[%s608] sm:$0xff]
        %vm853 = vcmask 64512
        %v855 = vsel %vm853, %v780, 0
        %v858 = vsel %vm853, %v848, 0
        %860 = vmatprep.subr.bf16.mxu0 0
        %861 = vmatpush1.bf16.xpose.msra.mxu0 %v858
        %862 = vmatprep.subr.bf16.mxu0 0
        %863 = vmatpush1.bf16.xpose.msra.mxu0 0
        %864 = vmatprep.subr.bf16.mxu0 0
        %865 = vmatpush1.bf16.xpose.msra.mxu0 0
        %866 = vmatprep.subr.bf16.mxu0 0
        %867 = vmatpush1.bf16.xpose.msra.mxu0 0
        %868 = vmatprep.subr.bf16.mxu0 0
        %869 = vmatpush1.bf16.xpose.msra.mxu0 0
        %870 = vmatprep.subr.bf16.mxu0 0
        %871 = vmatpush1.bf16.xpose.msra.mxu0 0
        %872 = vmatprep.subr.bf16.mxu0 0
        %873 = vmatpush1.bf16.xpose.msra.mxu0 0
        %874 = vmatprep.subr.bf16.mxu0 0
        %875 = vmatpush1.bf16.xpose.msra.mxu0 0
        %876 = vmatprep.subr.bf16.mxu0 0
        %877 = vmatpush1.bf16.xpose.msra.mxu0 0
        %878 = vmatprep.subr.bf16.mxu0 0
        %879 = vmatpush1.bf16.xpose.msra.mxu0 0
        %880 = vmatprep.subr.bf16.mxu0 0
        %881 = vmatpush1.bf16.xpose.msra.mxu0 0
        %882 = vmatprep.subr.bf16.mxu0 0
        %883 = vmatpush1.bf16.xpose.msra.mxu0 0
        %884 = vmatprep.subr.bf16.mxu0 0
        %885 = vmatpush1.bf16.xpose.msra.mxu0 0
        %886 = vmatprep.subr.bf16.mxu0 0
        %887 = vmatpush1.bf16.xpose.msra.mxu0 0
        %888 = vmatprep.subr.bf16.mxu0 0
        %889 = vmatpush1.bf16.xpose.msra.mxu0 0
        %890 = vmatprep.subr.bf16.mxu0 0
        %891 = vmatpush1.bf16.xpose.msra.mxu0 0
        %892 = vmatprep.mubr.bf16.mxu0 0
        %893 = vmatmul.mubr.bf16.gmra.mrb[0].mxu0 %v855
        %v894 = vpop.f32.mrb[0].mxu0
        %v895 = vadd.f32 %v852, %v894
        %v896 = vpop.f32.mrb[0].mxu0
        %v897 = vpop.f32.mrb[0].mxu0
        %v898 = vpop.f32.mrb[0].mxu0
        %899 = vdwg.mxu0
        %v901 = vsel %vm853, %v781, 0
        %v904 = vsel %vm853, %v849, 0
        %906 = vmatprep.subr.bf16.mxu0 0
        %907 = vmatpush1.bf16.xpose.msra.mxu0 %v904
        %908 = vmatprep.subr.bf16.mxu0 0
        %909 = vmatpush1.bf16.xpose.msra.mxu0 0
        %910 = vmatprep.subr.bf16.mxu0 0
        %911 = vmatpush1.bf16.xpose.msra.mxu0 0
        %912 = vmatprep.subr.bf16.mxu0 0
        %913 = vmatpush1.bf16.xpose.msra.mxu0 0
        %914 = vmatprep.subr.bf16.mxu0 0
        %915 = vmatpush1.bf16.xpose.msra.mxu0 0
        %916 = vmatprep.subr.bf16.mxu0 0
        %917 = vmatpush1.bf16.xpose.msra.mxu0 0
        %918 = vmatprep.subr.bf16.mxu0 0
        %919 = vmatpush1.bf16.xpose.msra.mxu0 0
        %920 = vmatprep.subr.bf16.mxu0 0
        %921 = vmatpush1.bf16.xpose.msra.mxu0 0
        %922 = vmatprep.subr.bf16.mxu0 0
        %923 = vmatpush1.bf16.xpose.msra.mxu0 0
        %924 = vmatprep.subr.bf16.mxu0 0
        %925 = vmatpush1.bf16.xpose.msra.mxu0 0
        %926 = vmatprep.subr.bf16.mxu0 0
        %927 = vmatpush1.bf16.xpose.msra.mxu0 0
        %928 = vmatprep.subr.bf16.mxu0 0
        %929 = vmatpush1.bf16.xpose.msra.mxu0 0
        %930 = vmatprep.subr.bf16.mxu0 0
        %931 = vmatpush1.bf16.xpose.msra.mxu0 0
        %932 = vmatprep.subr.bf16.mxu0 0
        %933 = vmatpush1.bf16.xpose.msra.mxu0 0
        %934 = vmatprep.subr.bf16.mxu0 0
        %935 = vmatpush1.bf16.xpose.msra.mxu0 0
        %936 = vmatprep.subr.bf16.mxu0 0
        %937 = vmatpush1.bf16.xpose.msra.mxu0 0
        %938 = vmatprep.mubr.bf16.mxu0 0
        %939 = vmatmul.mubr.bf16.gmra.mrb[0].mxu0 %v901
        %v940 = vpop.f32.mrb[0].mxu0
        %v941 = vadd.f32 %v852, %v940
        %v942 = vpop.f32.mrb[0].mxu0
        %v943 = vpop.f32.mrb[0].mxu0
        %v944 = vpop.f32.mrb[0].mxu0
        %945 = vdwg.mxu0
        %v947 = vsel %vm853, %v782, 0
        %v950 = vsel %vm853, %v850, 0
        %952 = vmatprep.subr.bf16.mxu0 0
        %953 = vmatpush1.bf16.xpose.msra.mxu0 %v950
        %954 = vmatprep.subr.bf16.mxu0 0
        %955 = vmatpush1.bf16.xpose.msra.mxu0 0
        %956 = vmatprep.subr.bf16.mxu0 0
        %957 = vmatpush1.bf16.xpose.msra.mxu0 0
        %958 = vmatprep.subr.bf16.mxu0 0
        %959 = vmatpush1.bf16.xpose.msra.mxu0 0
        %960 = vmatprep.subr.bf16.mxu0 0
        %961 = vmatpush1.bf16.xpose.msra.mxu0 0
        %962 = vmatprep.subr.bf16.mxu0 0
        %963 = vmatpush1.bf16.xpose.msra.mxu0 0
        %964 = vmatprep.subr.bf16.mxu0 0
        %965 = vmatpush1.bf16.xpose.msra.mxu0 0
        %966 = vmatprep.subr.bf16.mxu0 0
        %967 = vmatpush1.bf16.xpose.msra.mxu0 0
        %968 = vmatprep.subr.bf16.mxu0 0
        %969 = vmatpush1.bf16.xpose.msra.mxu0 0
        %970 = vmatprep.subr.bf16.mxu0 0
        %971 = vmatpush1.bf16.xpose.msra.mxu0 0
        %972 = vmatprep.subr.bf16.mxu0 0
        %973 = vmatpush1.bf16.xpose.msra.mxu0 0
        %974 = vmatprep.subr.bf16.mxu0 0
        %975 = vmatpush1.bf16.xpose.msra.mxu0 0
        %976 = vmatprep.subr.bf16.mxu0 0
        %977 = vmatpush1.bf16.xpose.msra.mxu0 0
        %978 = vmatprep.subr.bf16.mxu0 0
        %979 = vmatpush1.bf16.xpose.msra.mxu0 0
        %980 = vmatprep.subr.bf16.mxu0 0
        %981 = vmatpush1.bf16.xpose.msra.mxu0 0
        %982 = vmatprep.subr.bf16.mxu0 0
        %983 = vmatpush1.bf16.xpose.msra.mxu0 0
        %984 = vmatprep.mubr.bf16.mxu0 0
        %985 = vmatmul.mubr.bf16.gmra.mrb[0].mxu0 %v947
        %v986 = vpop.f32.mrb[0].mxu0
        %v987 = vadd.f32 %v852, %v986
        %v988 = vpop.f32.mrb[0].mxu0
        %v989 = vpop.f32.mrb[0].mxu0
        %v990 = vpop.f32.mrb[0].mxu0
        %991 = vdwg.mxu0
        %v993 = vsel %vm853, %v783, 0
        %v996 = vsel %vm853, %v851, 0
        %998 = vmatprep.subr.bf16.mxu0 0
        %999 = vmatpush1.bf16.xpose.msra.mxu0 %v996
        %1000 = vmatprep.subr.bf16.mxu0 0
        %1001 = vmatpush1.bf16.xpose.msra.mxu0 0
        %1002 = vmatprep.subr.bf16.mxu0 0
        %1003 = vmatpush1.bf16.xpose.msra.mxu0 0
        %1004 = vmatprep.subr.bf16.mxu0 0
        %1005 = vmatpush1.bf16.xpose.msra.mxu0 0
        %1006 = vmatprep.subr.bf16.mxu0 0
        %1007 = vmatpush1.bf16.xpose.msra.mxu0 0
        %1008 = vmatprep.subr.bf16.mxu0 0
        %1009 = vmatpush1.bf16.xpose.msra.mxu0 0
        %1010 = vmatprep.subr.bf16.mxu0 0
        %1011 = vmatpush1.bf16.xpose.msra.mxu0 0
        %1012 = vmatprep.subr.bf16.mxu0 0
        %1013 = vmatpush1.bf16.xpose.msra.mxu0 0
        %1014 = vmatprep.subr.bf16.mxu0 0
        %1015 = vmatpush1.bf16.xpose.msra.mxu0 0
        %1016 = vmatprep.subr.bf16.mxu0 0
        %1017 = vmatpush1.bf16.xpose.msra.mxu0 0
        %1018 = vmatprep.subr.bf16.mxu0 0
        %1019 = vmatpush1.bf16.xpose.msra.mxu0 0
        %1020 = vmatprep.subr.bf16.mxu0 0
        %1021 = vmatpush1.bf16.xpose.msra.mxu0 0
        %1022 = vmatprep.subr.bf16.mxu0 0
        %1023 = vmatpush1.bf16.xpose.msra.mxu0 0
        %1024 = vmatprep.subr.bf16.mxu0 0
        %1025 = vmatpush1.bf16.xpose.msra.mxu0 0
        %1026 = vmatprep.subr.bf16.mxu0 0
        %1027 = vmatpush1.bf16.xpose.msra.mxu0 0
        %1028 = vmatprep.subr.bf16.mxu0 0
        %1029 = vmatpush1.bf16.xpose.msra.mxu0 0
        %1030 = vmatprep.mubr.bf16.mxu0 0
        %1031 = vmatmul.mubr.bf16.gmra.mrb[0].mxu0 %v993
        %v1032 = vpop.f32.mrb[0].mxu0
        %v1033 = vadd.f32 %v852, %v1032
        %v1034 = vpop.f32.mrb[0].mxu0
        %v1035 = vpop.f32.mrb[0].mxu0
        %v1036 = vpop.f32.mrb[0].mxu0
        %1037 = vdwg.mxu0
        %v1038 = vld [vmem:[#allocation2] sm:$0xff]
        %v1039 = vld [vmem:[#allocation2 + $0x8] sm:$0xff]
        %v1040 = vld [vmem:[#allocation2 + $0x10] sm:$0xff]
        %v1041 = vld [vmem:[#allocation2 + $0x18] sm:$0xff]
        %v1042 = vsel %vm853, %v895, -inf
        %1043 = vmax.xlane.f32.xlu0 %v1042
        %v1044 = vpop.xlane.xlu0 %1043
        %v1045 = vsel %vm853, %v941, -inf
        %1046 = vmax.xlane.f32.xlu0 %v1045
        %v1047 = vpop.xlane.xlu0 %1046
        %v1048 = vsel %vm853, %v987, -inf
        %1049 = vmax.xlane.f32.xlu0 %v1048
        %v1050 = vpop.xlane.xlu0 %1049
        %v1051 = vsel %vm853, %v1033, -inf
        %1052 = vmax.xlane.f32.xlu0 %v1051
        %v1053 = vpop.xlane.xlu0 %1052
        %v1054 = vmax.f32 %v1038, %v1044
        %v1055 = vmax.f32 %v1039, %v1047
        %v1056 = vmax.f32 %v1040, %v1050
        %v1057 = vmax.f32 %v1041, %v1053
        %v1058 = vsub.f32 %v1038, %v1054
        %v1059 = vsub.f32 %v1039, %v1055
        %v1060 = vsub.f32 %v1040, %v1056
        %v1061 = vsub.f32 %v1041, %v1057
        %v1062 = vmul.f32 %v1058, 1.442695
        %v1063 = vpow.pop %v1062
        %v1064 = vmul.f32 %v1059, 1.442695
        %v1065 = vpow.pop %v1064
        %v1066 = vmul.f32 %v1060, 1.442695
        %v1067 = vpow.pop %v1066
        %v1068 = vmul.f32 %v1061, 1.442695
        %v1069 = vpow.pop %v1068
        %1071 = vset.pattern.permute.xlu0 0
        %1072 = vperm.xlu0 %1071, %v1054
        %v1073 = vpop.permute.xlu0 %1072
        %1076 = vset.pattern.permute.xlu0 0
        %1077 = vperm.xlu0 %1076, %v1055
        %v1078 = vpop.permute.xlu0 %1077
        %1081 = vset.pattern.permute.xlu0 0
        %1082 = vperm.xlu0 %1081, %v1056
        %v1083 = vpop.permute.xlu0 %1082
        %1086 = vset.pattern.permute.xlu0 0
        %1087 = vperm.xlu0 %1086, %v1057
        %v1088 = vpop.permute.xlu0 %1087
        %v1090 = vsub.f32 %v895, %v1073
        %v1091 = vsub.f32 %v941, %v1078
        %v1092 = vsub.f32 %v987, %v1083
        %v1093 = vsub.f32 %v1033, %v1088
        %v1094 = vmul.f32 %v1090, 1.442695
        %v1095 = vpow.pop %v1094
        %v1096 = vmul.f32 %v1091, 1.442695
        %v1097 = vpow.pop %v1096
        %v1098 = vmul.f32 %v1092, 1.442695
        %v1099 = vpow.pop %v1098
        %v1100 = vmul.f32 %v1093, 1.442695
        %v1101 = vpow.pop %v1100
        %v1102 = vld [vmem:[#allocation3] sm:$0xff]
        %v1103 = vld [vmem:[#allocation3 + $0x8] sm:$0xff]
        %v1104 = vld [vmem:[#allocation3 + $0x10] sm:$0xff]
        %v1105 = vld [vmem:[#allocation3 + $0x18] sm:$0xff]
        %v1106 = vmul.f32 %v1063, %v1102
        %v1107 = vmul.f32 %v1065, %v1103
        %v1108 = vmul.f32 %v1067, %v1104
        %v1109 = vmul.f32 %v1069, %v1105
        %v1110 = vsel %vm853, %v1095, 0.0
        %1111 = vadd.xlane.f32.xlu0 %v1110
        %v1112 = vpop.xlane.xlu0 %1111
        %v1113 = vsel %vm853, %v1097, 0.0
        %1114 = vadd.xlane.f32.xlu0 %v1113
        %v1115 = vpop.xlane.xlu0 %1114
        %v1116 = vsel %vm853, %v1099, 0.0
        %1117 = vadd.xlane.f32.xlu0 %v1116
        %v1118 = vpop.xlane.xlu0 %1117
        %v1119 = vsel %vm853, %v1101, 0.0
        %1120 = vadd.xlane.f32.xlu0 %v1119
        %v1121 = vpop.xlane.xlu0 %1120
        %v1122 = vadd.f32 %v1106, %v1112
        %v1123 = vadd.f32 %v1107, %v1115
        %v1124 = vadd.f32 %v1108, %v1118
        %v1125 = vadd.f32 %v1109, %v1121
        %vm1126 = vcmask 7168
        %1127 = vst.msk [vmem:[#allocation3] sm:$0xff] %vm1126, %v1122
        %1128 = vst.msk [vmem:[#allocation3 + $0x8] sm:$0xff] %vm1126, %v1123
        %1129 = vst.msk [vmem:[#allocation3 + $0x10] sm:$0xff] %vm1126, %v1124
        %1130 = vst.msk [vmem:[#allocation3 + $0x18] sm:$0xff] %vm1126, %v1125
        %v1131 = vld [vmem:[#allocation4] sm:$0xff]
        %v1132 = vld [vmem:[#allocation4 + $0x8] sm:$0xff]
        %v1133 = vld [vmem:[#allocation4 + $0x10] sm:$0xff]
        %v1134 = vld [vmem:[#allocation4 + $0x18] sm:$0xff]
        %1136 = vset.pattern.permute.xlu0 0
        %1137 = vperm.xlu0 %1136, %v1063
        %v1138 = vpop.permute.xlu0 %1137
        %1141 = vset.pattern.permute.xlu0 0
        %1142 = vperm.xlu0 %1141, %v1065
        %v1143 = vpop.permute.xlu0 %1142
        %1146 = vset.pattern.permute.xlu0 0
        %1147 = vperm.xlu0 %1146, %v1067
        %v1148 = vpop.permute.xlu0 %1147
        %1151 = vset.pattern.permute.xlu0 0
        %1152 = vperm.xlu0 %1151, %v1069
        %v1153 = vpop.permute.xlu0 %1152
        %v1155 = vmul.f32 %v1138, %v1131
        %v1156 = vmul.f32 %v1143, %v1132
        %v1157 = vmul.f32 %v1148, %v1133
        %v1158 = vmul.f32 %v1153, %v1134
        %v1159 = vpack.c.bf16 %v1095, %v1095
        %v1160 = vpack.c.bf16 %v1097, %v1097
        %v1161 = vpack.c.bf16 %v1099, %v1099
        %v1162 = vpack.c.bf16 %v1101, %v1101
        %v1163 = vld [vmem:[%s601] sm:$0xf]
        %v1164 = vld [vmem:[%s601 + $0x4] sm:$0xf]
        %v1165 = vld [vmem:[%s601 + $0x8] sm:$0xf]
        %v1166 = vld [vmem:[%s601 + $0xc] sm:$0xf]
        %v1168 = vsel %vm853, %v1159, 0
        %vm1170 = vcmask 1043456
        %v1172 = vsel %vm1170, %v1163, 0
        %1174 = vmatprep.subr.bf16.mxu0 0
        %1175 = vmatpush1.bf16.msra.mxu0 %v1172
        %1176 = vmatprep.subr.bf16.mxu0 0
        %1177 = vmatpush1.bf16.msra.mxu0 0
        %1178 = vmatprep.subr.bf16.mxu0 0
        %1179 = vmatpush1.bf16.msra.mxu0 0
        %1180 = vmatprep.subr.bf16.mxu0 0
        %1181 = vmatpush1.bf16.msra.mxu0 0
        %1182 = vmatprep.subr.bf16.mxu0 0
        %1183 = vmatpush1.bf16.msra.mxu0 0
        %1184 = vmatprep.subr.bf16.mxu0 0
        %1185 = vmatpush1.bf16.msra.mxu0 0
        %1186 = vmatprep.subr.bf16.mxu0 0
        %1187 = vmatpush1.bf16.msra.mxu0 0
        %1188 = vmatprep.subr.bf16.mxu0 0
        %1189 = vmatpush1.bf16.msra.mxu0 0
        %1190 = vmatprep.subr.bf16.mxu0 0
        %1191 = vmatpush1.bf16.msra.mxu0 0
        %1192 = vmatprep.subr.bf16.mxu0 0
        %1193 = vmatpush1.bf16.msra.mxu0 0
        %1194 = vmatprep.subr.bf16.mxu0 0
        %1195 = vmatpush1.bf16.msra.mxu0 0
        %1196 = vmatprep.subr.bf16.mxu0 0
        %1197 = vmatpush1.bf16.msra.mxu0 0
        %1198 = vmatprep.subr.bf16.mxu0 0
        %1199 = vmatpush1.bf16.msra.mxu0 0
        %1200 = vmatprep.subr.bf16.mxu0 0
        %1201 = vmatpush1.bf16.msra.mxu0 0
        %1202 = vmatprep.subr.bf16.mxu0 0
        %1203 = vmatpush1.bf16.msra.mxu0 0
        %1204 = vmatprep.subr.bf16.mxu0 0
        %1205 = vmatpush1.bf16.msra.mxu0 0
        %1206 = vmatprep.mubr.bf16.mxu0 0
        %1207 = vmatmul.mubr.bf16.gmra.mrb[0].mxu0 %v1168
        %v1208 = vpop.f32.mrb[0].mxu0
        %v1209 = vadd.f32 0.0, %v1208
        %v1210 = vpop.f32.mrb[0].mxu0
        %v1211 = vpop.f32.mrb[0].mxu0
        %v1212 = vpop.f32.mrb[0].mxu0
        %1213 = vdwg.mxu0
        %v1215 = vsel %vm853, %v1160, 0
        %v1218 = vsel %vm1170, %v1164, 0
        %1220 = vmatprep.subr.bf16.mxu0 0
        %1221 = vmatpush1.bf16.msra.mxu0 %v1218
        %1222 = vmatprep.subr.bf16.mxu0 0
        %1223 = vmatpush1.bf16.msra.mxu0 0
        %1224 = vmatprep.subr.bf16.mxu0 0
        %1225 = vmatpush1.bf16.msra.mxu0 0
        %1226 = vmatprep.subr.bf16.mxu0 0
        %1227 = vmatpush1.bf16.msra.mxu0 0
        %1228 = vmatprep.subr.bf16.mxu0 0
        %1229 = vmatpush1.bf16.msra.mxu0 0
        %1230 = vmatprep.subr.bf16.mxu0 0
        %1231 = vmatpush1.bf16.msra.mxu0 0
        %1232 = vmatprep.subr.bf16.mxu0 0
        %1233 = vmatpush1.bf16.msra.mxu0 0
        %1234 = vmatprep.subr.bf16.mxu0 0
        %1235 = vmatpush1.bf16.msra.mxu0 0
        %1236 = vmatprep.subr.bf16.mxu0 0
        %1237 = vmatpush1.bf16.msra.mxu0 0
        %1238 = vmatprep.subr.bf16.mxu0 0
        %1239 = vmatpush1.bf16.msra.mxu0 0
        %1240 = vmatprep.subr.bf16.mxu0 0
        %1241 = vmatpush1.bf16.msra.mxu0 0
        %1242 = vmatprep.subr.bf16.mxu0 0
        %1243 = vmatpush1.bf16.msra.mxu0 0
        %1244 = vmatprep.subr.bf16.mxu0 0
        %1245 = vmatpush1.bf16.msra.mxu0 0
        %1246 = vmatprep.subr.bf16.mxu0 0
        %1247 = vmatpush1.bf16.msra.mxu0 0
        %1248 = vmatprep.subr.bf16.mxu0 0
        %1249 = vmatpush1.bf16.msra.mxu0 0
        %1250 = vmatprep.subr.bf16.mxu0 0
        %1251 = vmatpush1.bf16.msra.mxu0 0
        %1252 = vmatprep.mubr.bf16.mxu0 0
        %1253 = vmatmul.mubr.bf16.gmra.mrb[0].mxu0 %v1215
        %v1254 = vpop.f32.mrb[0].mxu0
        %v1255 = vadd.f32 0.0, %v1254
        %v1256 = vpop.f32.mrb[0].mxu0
        %v1257 = vpop.f32.mrb[0].mxu0
        %v1258 = vpop.f32.mrb[0].mxu0
        %1259 = vdwg.mxu0
        %v1261 = vsel %vm853, %v1161, 0
        %v1264 = vsel %vm1170, %v1165, 0
        %1266 = vmatprep.subr.bf16.mxu0 0
        %1267 = vmatpush1.bf16.msra.mxu0 %v1264
        %1268 = vmatprep.subr.bf16.mxu0 0
        %1269 = vmatpush1.bf16.msra.mxu0 0
        %1270 = vmatprep.subr.bf16.mxu0 0
        %1271 = vmatpush1.bf16.msra.mxu0 0
        %1272 = vmatprep.subr.bf16.mxu0 0
        %1273 = vmatpush1.bf16.msra.mxu0 0
        %1274 = vmatprep.subr.bf16.mxu0 0
        %1275 = vmatpush1.bf16.msra.mxu0 0
        %1276 = vmatprep.subr.bf16.mxu0 0
        %1277 = vmatpush1.bf16.msra.mxu0 0
        %1278 = vmatprep.subr.bf16.mxu0 0
        %1279 = vmatpush1.bf16.msra.mxu0 0
        %1280 = vmatprep.subr.bf16.mxu0 0
        %1281 = vmatpush1.bf16.msra.mxu0 0
        %1282 = vmatprep.subr.bf16.mxu0 0
        %1283 = vmatpush1.bf16.msra.mxu0 0
        %1284 = vmatprep.subr.bf16.mxu0 0
        %1285 = vmatpush1.bf16.msra.mxu0 0
        %1286 = vmatprep.subr.bf16.mxu0 0
        %1287 = vmatpush1.bf16.msra.mxu0 0
        %1288 = vmatprep.subr.bf16.mxu0 0
        %1289 = vmatpush1.bf16.msra.mxu0 0
        %1290 = vmatprep.subr.bf16.mxu0 0
        %1291 = vmatpush1.bf16.msra.mxu0 0
        %1292 = vmatprep.subr.bf16.mxu0 0
        %1293 = vmatpush1.bf16.msra.mxu0 0
        %1294 = vmatprep.subr.bf16.mxu0 0
        %1295 = vmatpush1.bf16.msra.mxu0 0
        %1296 = vmatprep.subr.bf16.mxu0 0
        %1297 = vmatpush1.bf16.msra.mxu0 0
        %1298 = vmatprep.mubr.bf16.mxu0 0
        %1299 = vmatmul.mubr.bf16.gmra.mrb[0].mxu0 %v1261
        %v1300 = vpop.f32.mrb[0].mxu0
        %v1301 = vadd.f32 0.0, %v1300
        %v1302 = vpop.f32.mrb[0].mxu0
        %v1303 = vpop.f32.mrb[0].mxu0
        %v1304 = vpop.f32.mrb[0].mxu0
        %1305 = vdwg.mxu0
        %v1307 = vsel %vm853, %v1162, 0
        %v1310 = vsel %vm1170, %v1166, 0
        %1312 = vmatprep.subr.bf16.mxu0 0
        %1313 = vmatpush1.bf16.msra.mxu0 %v1310
        %1314 = vmatprep.subr.bf16.mxu0 0
        %1315 = vmatpush1.bf16.msra.mxu0 0
        %1316 = vmatprep.subr.bf16.mxu0 0
        %1317 = vmatpush1.bf16.msra.mxu0 0
        %1318 = vmatprep.subr.bf16.mxu0 0
        %1319 = vmatpush1.bf16.msra.mxu0 0
        %1320 = vmatprep.subr.bf16.mxu0 0
        %1321 = vmatpush1.bf16.msra.mxu0 0
        %1322 = vmatprep.subr.bf16.mxu0 0
        %1323 = vmatpush1.bf16.msra.mxu0 0
        %1324 = vmatprep.subr.bf16.mxu0 0
        %1325 = vmatpush1.bf16.msra.mxu0 0
        %1326 = vmatprep.subr.bf16.mxu0 0
        %1327 = vmatpush1.bf16.msra.mxu0 0
        %1328 = vmatprep.subr.bf16.mxu0 0
        %1329 = vmatpush1.bf16.msra.mxu0 0
        %1330 = vmatprep.subr.bf16.mxu0 0
        %1331 = vmatpush1.bf16.msra.mxu0 0
        %1332 = vmatprep.subr.bf16.mxu0 0
        %1333 = vmatpush1.bf16.msra.mxu0 0
        %1334 = vmatprep.subr.bf16.mxu0 0
        %1335 = vmatpush1.bf16.msra.mxu0 0
        %1336 = vmatprep.subr.bf16.mxu0 0
        %1337 = vmatpush1.bf16.msra.mxu0 0
        %1338 = vmatprep.subr.bf16.mxu0 0
        %1339 = vmatpush1.bf16.msra.mxu0 0
        %1340 = vmatprep.subr.bf16.mxu0 0
        %1341 = vmatpush1.bf16.msra.mxu0 0
        %1342 = vmatprep.subr.bf16.mxu0 0
        %1343 = vmatpush1.bf16.msra.mxu0 0
        %1344 = vmatprep.mubr.bf16.mxu0 0
        %1345 = vmatmul.mubr.bf16.gmra.mrb[0].mxu0 %v1307
        %v1346 = vpop.f32.mrb[0].mxu0
        %v1347 = vadd.f32 0.0, %v1346
        %v1348 = vpop.f32.mrb[0].mxu0
        %v1349 = vpop.f32.mrb[0].mxu0
        %v1350 = vpop.f32.mrb[0].mxu0
        %1351 = vdwg.mxu0
        %v1352 = vadd.f32 %v1155, %v1209
        %v1353 = vadd.f32 %v1156, %v1255
        %v1354 = vadd.f32 %v1157, %v1301
        %v1355 = vadd.f32 %v1158, %v1347
        %1356 = vst.msk [vmem:[#allocation4] sm:$0xff] %vm853, %v1352
        %1357 = vst.msk [vmem:[#allocation4 + $0x8] sm:$0xff] %vm853, %v1353
        %1358 = vst.msk [vmem:[#allocation4 + $0x10] sm:$0xff] %vm853, %v1354
        %1359 = vst.msk [vmem:[#allocation4 + $0x18] sm:$0xff] %vm853, %v1355
        %1360 = vst.msk [vmem:[#allocation2] sm:$0xff] %vm1126, %v1054
        %1361 = vst.msk [vmem:[#allocation2 + $0x8] sm:$0xff] %vm1126, %v1055
        %1362 = vst.msk [vmem:[#allocation2 + $0x10] sm:$0xff] %vm1126, %v1056
        %1363 = vst.msk [vmem:[#allocation2 + $0x18] sm:$0xff] %vm1126, %v1057
        // Predicated region
        $region81: #{transformer_layer.3} parent=75 // pred_check
          %p1364 = pneg %p617
        $region82: #{transformer_layer.3} parent=75 // pred_check_branch
          %1366 = sbr.rel (%p1364) target = $region84
        $region83: #{transformer_layer.3} parent=75 // pred_region
          %v1367 = vld [vmem:[#allocation4] sm:$0xff]
          %v1368 = vld [vmem:[#allocation4 + $0x8] sm:$0xff]
          %v1369 = vld [vmem:[#allocation4 + $0x10] sm:$0xff]
          %v1370 = vld [vmem:[#allocation4 + $0x18] sm:$0xff]
          %v1371 = vld [vmem:[#allocation3] sm:$0xff]
          %v1372 = vld [vmem:[#allocation3 + $0x8] sm:$0xff]
          %v1373 = vld [vmem:[#allocation3 + $0x10] sm:$0xff]
          %v1374 = vld [vmem:[#allocation3 + $0x18] sm:$0xff]
          %v1375 = vrcp.pop %v1371
          %v1376 = vrcp.pop %v1372
          %v1377 = vrcp.pop %v1373
          %v1378 = vrcp.pop %v1374
          %1380 = vset.pattern.permute.xlu0 0
          %1381 = vperm.xlu0 %1380, %v1375
          %v1382 = vpop.permute.xlu0 %1381
          %1385 = vset.pattern.permute.xlu0 0
          %1386 = vperm.xlu0 %1385, %v1376
          %v1387 = vpop.permute.xlu0 %1386
          %1390 = vset.pattern.permute.xlu0 0
          %1391 = vperm.xlu0 %1390, %v1377
          %v1392 = vpop.permute.xlu0 %1391
          %1395 = vset.pattern.permute.xlu0 0
          %1396 = vperm.xlu0 %1395, %v1378
          %v1397 = vpop.permute.xlu0 %1396
          %v1399 = vmul.f32 %v1367, %v1382
          %v1400 = vmul.f32 %v1368, %v1387
          %v1401 = vmul.f32 %v1369, %v1392
          %v1402 = vmul.f32 %v1370, %v1397
          %v1403 = vpack.c.bf16 %v1399, %v1399
          %v1404 = vpack.c.bf16 %v1400, %v1400
          %v1405 = vpack.c.bf16 %v1401, %v1401
          %v1406 = vpack.c.bf16 %v1402, %v1402
          %v1407 = vld [vmem:[%s7] sm:$0xf]
          %v1408 = vld [vmem:[%s7 + $0x4] sm:$0xf]
          %v1409 = vld [vmem:[%s7 + $0x8] sm:$0xf]
          %v1410 = vld [vmem:[%s7 + $0xc] sm:$0xf]
          %v1412 = vsel %vm853, %v1403, 0
          %v1415 = vsel %vm1170, %v1407, 0
          %1417 = vmatprep.subr.bf16.mxu0 0
          %1418 = vmatpush1.bf16.msra.mxu0 %v1415
          %1419 = vmatprep.subr.bf16.mxu0 0
          %1420 = vmatpush1.bf16.msra.mxu0 0
          %1421 = vmatprep.subr.bf16.mxu0 0
          %1422 = vmatpush1.bf16.msra.mxu0 0
          %1423 = vmatprep.subr.bf16.mxu0 0
          %1424 = vmatpush1.bf16.msra.mxu0 0
          %1425 = vmatprep.subr.bf16.mxu0 0
          %1426 = vmatpush1.bf16.msra.mxu0 0
          %1427 = vmatprep.subr.bf16.mxu0 0
          %1428 = vmatpush1.bf16.msra.mxu0 0
          %1429 = vmatprep.subr.bf16.mxu0 0
          %1430 = vmatpush1.bf16.msra.mxu0 0
          %1431 = vmatprep.subr.bf16.mxu0 0
          %1432 = vmatpush1.bf16.msra.mxu0 0
          %1433 = vmatprep.subr.bf16.mxu0 0
          %1434 = vmatpush1.bf16.msra.mxu0 0
          %1435 = vmatprep.subr.bf16.mxu0 0
          %1436 = vmatpush1.bf16.msra.mxu0 0
          %1437 = vmatprep.subr.bf16.mxu0 0
          %1438 = vmatpush1.bf16.msra.mxu0 0
          %1439 = vmatprep.subr.bf16.mxu0 0
          %1440 = vmatpush1.bf16.msra.mxu0 0
          %1441 = vmatprep.subr.bf16.mxu0 0
          %1442 = vmatpush1.bf16.msra.mxu0 0
          %1443 = vmatprep.subr.bf16.mxu0 0
          %1444 = vmatpush1.bf16.msra.mxu0 0
          %1445 = vmatprep.subr.bf16.mxu0 0
          %1446 = vmatpush1.bf16.msra.mxu0 0
          %1447 = vmatprep.subr.bf16.mxu0 0
          %1448 = vmatpush1.bf16.msra.mxu0 0
          %1449 = vmatprep.mubr.bf16.mxu0 0
          %1450 = vmatmul.mubr.bf16.gmra.mrb[0].mxu0 %v1412
          %v1451 = vpop.f32.mrb[0].mxu0
          %v1452 = vadd.f32 0.0, %v1451
          %v1453 = vpop.f32.mrb[0].mxu0
          %v1454 = vpop.f32.mrb[0].mxu0
          %v1455 = vpop.f32.mrb[0].mxu0
          %1456 = vdwg.mxu0
          %v1458 = vsel %vm853, %v1404, 0
          %v1461 = vsel %vm1170, %v1408, 0
          %1463 = vmatprep.subr.bf16.mxu0 0
          %1464 = vmatpush1.bf16.msra.mxu0 %v1461
          %1465 = vmatprep.subr.bf16.mxu0 0
          %1466 = vmatpush1.bf16.msra.mxu0 0
          %1467 = vmatprep.subr.bf16.mxu0 0
          %1468 = vmatpush1.bf16.msra.mxu0 0
          %1469 = vmatprep.subr.bf16.mxu0 0
          %1470 = vmatpush1.bf16.msra.mxu0 0
          %1471 = vmatprep.subr.bf16.mxu0 0
          %1472 = vmatpush1.bf16.msra.mxu0 0
          %1473 = vmatprep.subr.bf16.mxu0 0
          %1474 = vmatpush1.bf16.msra.mxu0 0
          %1475 = vmatprep.subr.bf16.mxu0 0
          %1476 = vmatpush1.bf16.msra.mxu0 0
          %1477 = vmatprep.subr.bf16.mxu0 0
          %1478 = vmatpush1.bf16.msra.mxu0 0
          %1479 = vmatprep.subr.bf16.mxu0 0
          %1480 = vmatpush1.bf16.msra.mxu0 0
          %1481 = vmatprep.subr.bf16.mxu0 0
          %1482 = vmatpush1.bf16.msra.mxu0 0
          %1483 = vmatprep.subr.bf16.mxu0 0
          %1484 = vmatpush1.bf16.msra.mxu0 0
          %1485 = vmatprep.subr.bf16.mxu0 0
          %1486 = vmatpush1.bf16.msra.mxu0 0
          %1487 = vmatprep.subr.bf16.mxu0 0
          %1488 = vmatpush1.bf16.msra.mxu0 0
          %1489 = vmatprep.subr.bf16.mxu0 0
          %1490 = vmatpush1.bf16.msra.mxu0 0
          %1491 = vmatprep.subr.bf16.mxu0 0
          %1492 = vmatpush1.bf16.msra.mxu0 0
          %1493 = vmatprep.subr.bf16.mxu0 0
          %1494 = vmatpush1.bf16.msra.mxu0 0
          %1495 = vmatprep.mubr.bf16.mxu0 0
          %1496 = vmatmul.mubr.bf16.gmra.mrb[0].mxu0 %v1458
          %v1497 = vpop.f32.mrb[0].mxu0
          %v1498 = vadd.f32 0.0, %v1497
          %v1499 = vpop.f32.mrb[0].mxu0
          %v1500 = vpop.f32.mrb[0].mxu0
          %v1501 = vpop.f32.mrb[0].mxu0
          %1502 = vdwg.mxu0
          %v1504 = vsel %vm853, %v1405, 0
          %v1507 = vsel %vm1170, %v1409, 0
          %1509 = vmatprep.subr.bf16.mxu0 0
          %1510 = vmatpush1.bf16.msra.mxu0 %v1507
          %1511 = vmatprep.subr.bf16.mxu0 0
          %1512 = vmatpush1.bf16.msra.mxu0 0
          %1513 = vmatprep.subr.bf16.mxu0 0
          %1514 = vmatpush1.bf16.msra.mxu0 0
          %1515 = vmatprep.subr.bf16.mxu0 0
          %1516 = vmatpush1.bf16.msra.mxu0 0
          %1517 = vmatprep.subr.bf16.mxu0 0
          %1518 = vmatpush1.bf16.msra.mxu0 0
          %1519 = vmatprep.subr.bf16.mxu0 0
          %1520 = vmatpush1.bf16.msra.mxu0 0
          %1521 = vmatprep.subr.bf16.mxu0 0
          %1522 = vmatpush1.bf16.msra.mxu0 0
          %1523 = vmatprep.subr.bf16.mxu0 0
          %1524 = vmatpush1.bf16.msra.mxu0 0
          %1525 = vmatprep.subr.bf16.mxu0 0
          %1526 = vmatpush1.bf16.msra.mxu0 0
          %1527 = vmatprep.subr.bf16.mxu0 0
          %1528 = vmatpush1.bf16.msra.mxu0 0
          %1529 = vmatprep.subr.bf16.mxu0 0
          %1530 = vmatpush1.bf16.msra.mxu0 0
          %1531 = vmatprep.subr.bf16.mxu0 0
          %1532 = vmatpush1.bf16.msra.mxu0 0
          %1533 = vmatprep.subr.bf16.mxu0 0
          %1534 = vmatpush1.bf16.msra.mxu0 0
          %1535 = vmatprep.subr.bf16.mxu0 0
          %1536 = vmatpush1.bf16.msra.mxu0 0
          %1537 = vmatprep.subr.bf16.mxu0 0
          %1538 = vmatpush1.bf16.msra.mxu0 0
          %1539 = vmatprep.subr.bf16.mxu0 0
          %1540 = vmatpush1.bf16.msra.mxu0 0
          %1541 = vmatprep.mubr.bf16.mxu0 0
          %1542 = vmatmul.mubr.bf16.gmra.mrb[0].mxu0 %v1504
          %v1543 = vpop.f32.mrb[0].mxu0
          %v1544 = vadd.f32 0.0, %v1543
          %v1545 = vpop.f32.mrb[0].mxu0
          %v1546 = vpop.f32.mrb[0].mxu0
          %v1547 = vpop.f32.mrb[0].mxu0
          %1548 = vdwg.mxu0
          %v1550 = vsel %vm853, %v1406, 0
          %v1553 = vsel %vm1170, %v1410, 0
          %1555 = vmatprep.subr.bf16.mxu0 0
          %1556 = vmatpush1.bf16.msra.mxu0 %v1553
          %1557 = vmatprep.subr.bf16.mxu0 0
          %1558 = vmatpush1.bf16.msra.mxu0 0
          %1559 = vmatprep.subr.bf16.mxu0 0
          %1560 = vmatpush1.bf16.msra.mxu0 0
          %1561 = vmatprep.subr.bf16.mxu0 0
          %1562 = vmatpush1.bf16.msra.mxu0 0
          %1563 = vmatprep.subr.bf16.mxu0 0
          %1564 = vmatpush1.bf16.msra.mxu0 0
          %1565 = vmatprep.subr.bf16.mxu0 0
          %1566 = vmatpush1.bf16.msra.mxu0 0
          %1567 = vmatprep.subr.bf16.mxu0 0
          %1568 = vmatpush1.bf16.msra.mxu0 0
          %1569 = vmatprep.subr.bf16.mxu0 0
          %1570 = vmatpush1.bf16.msra.mxu0 0
          %1571 = vmatprep.subr.bf16.mxu0 0
          %1572 = vmatpush1.bf16.msra.mxu0 0
          %1573 = vmatprep.subr.bf16.mxu0 0
          %1574 = vmatpush1.bf16.msra.mxu0 0
          %1575 = vmatprep.subr.bf16.mxu0 0
          %1576 = vmatpush1.bf16.msra.mxu0 0
          %1577 = vmatprep.subr.bf16.mxu0 0
          %1578 = vmatpush1.bf16.msra.mxu0 0
          %1579 = vmatprep.subr.bf16.mxu0 0
          %1580 = vmatpush1.bf16.msra.mxu0 0
          %1581 = vmatprep.subr.bf16.mxu0 0
          %1582 = vmatpush1.bf16.msra.mxu0 0
          %1583 = vmatprep.subr.bf16.mxu0 0
          %1584 = vmatpush1.bf16.msra.mxu0 0
          %1585 = vmatprep.subr.bf16.mxu0 0
          %1586 = vmatpush1.bf16.msra.mxu0 0
          %1587 = vmatprep.mubr.bf16.mxu0 0
          %1588 = vmatmul.mubr.bf16.gmra.mrb[0].mxu0 %v1550
          %v1589 = vpop.f32.mrb[0].mxu0
          %v1590 = vadd.f32 0.0, %v1589
          %v1591 = vpop.f32.mrb[0].mxu0
          %v1592 = vpop.f32.mrb[0].mxu0
          %v1593 = vpop.f32.mrb[0].mxu0
          %1594 = vdwg.mxu0
          %vm1595 = vcmask 261120
          %v1596 = vsel %vm1595, %v1452, 0.0
          %v1597 = vsel %vm1595, %v1498, 0.0
          %v1598 = vadd.f32 %v1596, %v1597
          %v1599 = vsel %vm1595, %v1544, 0.0
          %v1600 = vadd.f32 %v1598, %v1599
          %v1601 = vsel %vm1595, %v1590, 0.0
          %v1602 = vadd.f32 %v1600, %v1601
          %v1603 = vld [vmem:[%s8] sm:$0x1]
          %v1605 = vlaneseq
          %v1606 = vshrl.u32 %v1605, 7
          %v1607 = vsub.s32 0, %v1606
          %v1608 = vrot.slane %v1603, %v1607
          %v1610 = vadd.f32 %v1602, %v1608
          %v1611 = vld [vmem:[%s615] sm:$0xff]
          %v1612 = vadd.f32 %v1611, %v1610
          %v1613 = vld [vmem:[%s9] sm:$0x1]
          %v1614 = vmul.f32 %v1612, %v1612
          %v1615 = vsel %vm1595, %v1614, 0.0
          %1616 = vadd.xlane.f32.xlu0 %v1615
          %v1617 = vpop.xlane.xlu0 %1616
          %v1618 = vrcp.pop 32.0
          %v1619 = vmul.f32 %v1617, %v1618
          %v1620 = vadd.f32 %v1619, 1e-06
          %v1621 = vrsqrt.pop %v1620
          %v1622 = vmul.f32 %v1612, %v1621
          %v1624 = vlaneseq
          %v1625 = vshrl.u32 %v1624, 7
          %v1626 = vsub.s32 0, %v1625
          %v1627 = vrot.slane %v1613, %v1626
          %v1629 = vmul.f32 %v1622, %v1627
          %v1630 = vpack.c.bf16 %v1629, %v1629
          %v1631 = vld [vmem:[%s10] sm:$0xf]
          %v1632 = vld [vmem:[%s10 + $0x4] sm:$0xf]
          %v1633 = vld [vmem:[%s10 + $0x8] sm:$0xf]
          %v1634 = vld [vmem:[%s10 + $0xc] sm:$0xf]
          %v1635 = vld [vmem:[%s11] sm:$0x1]
          %v1637 = vlaneseq
          %v1638 = vshrl.u32 %v1637, 7
          %v1639 = vsub.s32 0, %v1638
          %v1640 = vrot.slane %v1635, %v1639
          %v1646 = vunpack.c.l.b16 %v1631
          %v1647 = vunpack.c.l.b16 %v1632
          %v1648 = vunpack.c.l.b16 %v1633
          %v1649 = vunpack.c.l.b16 %v1634
          %v1650 = vpack.c.b16 %v1647, %v1646
          %v1651 = vpack.c.b16 %v1649, %v1648
          %v1655 = vsel %vm1595, %v1630, 0
          %1657 = vmatprep.subr.bf16.mxu0 0
          %1658 = vmatpush1.bf16.msra.mxu0 %v1650
          %1659 = vmatprep.subr.bf16.mxu0 0
          %1660 = vmatpush1.bf16.msra.mxu0 %v1651
          %1661 = vmatprep.subr.bf16.mxu0 0
          %1662 = vmatpush1.bf16.msra.mxu0 0
          %1663 = vmatprep.subr.bf16.mxu0 0
          %1664 = vmatpush1.bf16.msra.mxu0 0
          %1665 = vmatprep.subr.bf16.mxu0 0
          %1666 = vmatpush1.bf16.msra.mxu0 0
          %1667 = vmatprep.subr.bf16.mxu0 0
          %1668 = vmatpush1.bf16.msra.mxu0 0
          %1669 = vmatprep.subr.bf16.mxu0 0
          %1670 = vmatpush1.bf16.msra.mxu0 0
          %1671 = vmatprep.subr.bf16.mxu0 0
          %1672 = vmatpush1.bf16.msra.mxu0 0
          %1673 = vmatprep.subr.bf16.mxu0 0
          %1674 = vmatpush1.bf16.msra.mxu0 0
          %1675 = vmatprep.subr.bf16.mxu0 0
          %1676 = vmatpush1.bf16.msra.mxu0 0
          %1677 = vmatprep.subr.bf16.mxu0 0
          %1678 = vmatpush1.bf16.msra.mxu0 0
          %1679 = vmatprep.subr.bf16.mxu0 0
          %1680 = vmatpush1.bf16.msra.mxu0 0
          %1681 = vmatprep.subr.bf16.mxu0 0
          %1682 = vmatpush1.bf16.msra.mxu0 0
          %1683 = vmatprep.subr.bf16.mxu0 0
          %1684 = vmatpush1.bf16.msra.mxu0 0
          %1685 = vmatprep.subr.bf16.mxu0 0
          %1686 = vmatpush1.bf16.msra.mxu0 0
          %1687 = vmatprep.subr.bf16.mxu0 0
          %1688 = vmatpush1.bf16.msra.mxu0 0
          %1689 = vmatprep.mubr.bf16.mxu0 0
          %1690 = vmatmul.mubr.bf16.gmra.mrb[0].mxu0 %v1655
          %v1691 = vpop.f32.mrb[0].mxu0
          %v1692 = vadd.f32 %v1640, %v1691
          %v1693 = vpop.f32.mrb[0].mxu0
          %v1694 = vpop.f32.mrb[0].mxu0
          %v1695 = vpop.f32.mrb[0].mxu0
          %1696 = vdwg.mxu0
          %v1697 = vmul.f32 %v1692, 0.5
          %v1698 = vmul.f32 %v1692, 0.70710677
          %vm1699 = vcmp.ge.f32.partialorder %v1698, 0.0
          %v1700 = vsel %vm1699, 1.0, -1.0
          %v1701 = vand.u32 2147483647, %v1698
          %v1702 = vmul.f32 %v1701, 0.3275911
          %v1703 = vadd.f32 %v1702, 1.0
          %v1704 = vrcp.pop %v1703
          %v1705 = vmul.f32 1.0, %v1704
          %v1706 = vmul.f32 %v1705, 1.0614054
          %v1707 = vadd.f32 %v1706, -1.4531521
          %v1708 = vmul.f32 %v1707, %v1705
          %v1709 = vadd.f32 %v1708, 1.4214138
          %v1710 = vmul.f32 %v1709, %v1705
          %v1711 = vadd.f32 %v1710, -0.28449672
          %v1712 = vmul.f32 %v1711, %v1705
          %v1713 = vadd.f32 %v1712, 0.2548296
          %v1714 = vmul.f32 %v1713, %v1705
          %v1715 = vsub.f32 0.0, %v1701
          %v1716 = vmul.f32 %v1715, %v1701
          %v1717 = vmul.f32 %v1716, 1.442695
          %v1718 = vpow.pop %v1717
          %v1719 = vmul.f32 %v1714, %v1718
          %v1720 = vsub.f32 1.0, %v1719
          %v1721 = vmul.f32 %v1700, %v1720
          %v1722 = vadd.f32 %v1721, 1.0
          %v1723 = vmul.f32 %v1697, %v1722
          %v1724 = vpack.c.bf16 %v1723, %v1723
          %v1725 = vld [vmem:[%s12] sm:$0xf]
          %v1726 = vld [vmem:[%s12 + $0x4] sm:$0xf]
          %v1727 = vld [vmem:[%s12 + $0x8] sm:$0xf]
          %v1728 = vld [vmem:[%s12 + $0xc] sm:$0xf]
          %v1729 = vld [vmem:[%s13] sm:$0x1]
          %v1731 = vlaneseq
          %v1732 = vshrl.u32 %v1731, 7
          %v1733 = vsub.s32 0, %v1732
          %v1734 = vrot.slane %v1729, %v1733
          %v1740 = vunpack.c.l.b16 %v1725
          %v1741 = vunpack.c.l.b16 %v1726
          %v1742 = vunpack.c.l.b16 %v1727
          %v1743 = vunpack.c.l.b16 %v1728
          %v1744 = vpack.c.b16 %v1741, %v1740
          %v1745 = vpack.c.b16 %v1743, %v1742
          %v1749 = vsel %vm1595, %v1724, 0
          %1751 = vmatprep.subr.bf16.mxu0 0
          %1752 = vmatpush1.bf16.msra.mxu0 %v1744
          %1753 = vmatprep.subr.bf16.mxu0 0
          %1754 = vmatpush1.bf16.msra.mxu0 %v1745
          %1755 = vmatprep.subr.bf16.mxu0 0
          %1756 = vmatpush1.bf16.msra.mxu0 0
          %1757 = vmatprep.subr.bf16.mxu0 0
          %1758 = vmatpush1.bf16.msra.mxu0 0
          %1759 = vmatprep.subr.bf16.mxu0 0
          %1760 = vmatpush1.bf16.msra.mxu0 0
          %1761 = vmatprep.subr.bf16.mxu0 0
          %1762 = vmatpush1.bf16.msra.mxu0 0
          %1763 = vmatprep.subr.bf16.mxu0 0
          %1764 = vmatpush1.bf16.msra.mxu0 0
          %1765 = vmatprep.subr.bf16.mxu0 0
          %1766 = vmatpush1.bf16.msra.mxu0 0
          %1767 = vmatprep.subr.bf16.mxu0 0
          %1768 = vmatpush1.bf16.msra.mxu0 0
          %1769 = vmatprep.subr.bf16.mxu0 0
          %1770 = vmatpush1.bf16.msra.mxu0 0
          %1771 = vmatprep.subr.bf16.mxu0 0
          %1772 = vmatpush1.bf16.msra.mxu0 0
          %1773 = vmatprep.subr.bf16.mxu0 0
          %1774 = vmatpush1.bf16.msra.mxu0 0
          %1775 = vmatprep.subr.bf16.mxu0 0
          %1776 = vmatpush1.bf16.msra.mxu0 0
          %1777 = vmatprep.subr.bf16.mxu0 0
          %1778 = vmatpush1.bf16.msra.mxu0 0
          %1779 = vmatprep.subr.bf16.mxu0 0
          %1780 = vmatpush1.bf16.msra.mxu0 0
          %1781 = vmatprep.subr.bf16.mxu0 0
          %1782 = vmatpush1.bf16.msra.mxu0 0
          %1783 = vmatprep.mubr.bf16.mxu0 0
          %1784 = vmatmul.mubr.bf16.gmra.mrb[0].mxu0 %v1749
          %v1785 = vpop.f32.mrb[0].mxu0
          %v1786 = vadd.f32 %v1734, %v1785
          %v1787 = vpop.f32.mrb[0].mxu0
          %v1788 = vpop.f32.mrb[0].mxu0
          %v1789 = vpop.f32.mrb[0].mxu0
          %1790 = vdwg.mxu0
          %v1791 = vadd.f32 %v1612, %v1786
          %1792 = vst.msk [vmem:[%s577] sm:$0xff] %vm1595, %v1791
        $region84: #{transformer_layer.3} parent=75 // pred_fallthru
          _
        %s1793 = sand.u32 %s386, 1
        %s1794 = scalar_lea.sflag [#allocation6], %s1793
        %s1795 = sand.u32 %s386, 1
        %s1796 = smul.addr %s1795, 8
        %s1797 = scalar_lea.vmem [#allocation5], %s1796
        // Predicated region
        $region85: #{transformer_layer.3} parent=75 // pred_check
          %p1798 = pneg %p396
        $region86: #{transformer_layer.3} parent=75 // pred_check_branch
          %1800 = sbr.rel (%p1798) target = $region88
        $region87: #{transformer_layer.3} parent=75 // pred_region
          %s1802 = ssub.s32 128, 128
          %1803 = vsyncadd %s1794, %s1802
          %s1804 = sadd.s32 %s34, %s33
          %s1805 = smul.addr %s1804, 128
          %s1806 = scalar_lea.hbm %s14, %s1805
          %s1808 = sshll.u32 %s1797, 4
          %s1809 = int_to_ptr.vmem [resolvable:$true] %s1808
          %1811 = dma.vmem_to_hbm [thread:$0]  %s1809, 128, %s1806, %s1794
        $region88: #{transformer_layer.3} parent=75 // pred_fallthru
          _
      $region76: #{transformer_layer.3} parent=5 // pred_fallthru
        _
      %p1812 = scmp.le.s32.totalorder 2, %s23
      // Predicated region
      $region89: #{transformer_layer.3} parent=5 // pred_check
        %p1813 = pneg %p1812
      $region90: #{transformer_layer.3} parent=5 // pred_check_branch
        %1815 = sbr.rel (%p1813) target = $region92
      $region91: #{transformer_layer.3} parent=5 // pred_region
        %s1816 = ssub.s32 %s23, 2
        // Predicated region
        $region93: #{transformer_layer.3} parent=91 // pred_check
          %p1817 = pneg %p402
        $region94: #{transformer_layer.3} parent=91 // pred_check_branch
          %1819 = sbr.rel (%p1817) target = $region96
        $region95: #{transformer_layer.3} parent=91 // pred_region
          %s1820 = sand.u32 %s387, 1
          %s1821 = scalar_lea.sflag [#allocation6], %s1820
          %s1822 = sand.u32 %s387, 1
          %s1823 = smul.addr %s1822, 8
          %s1824 = scalar_lea.vmem [#allocation5], %s1823
          %1825 = dma.done %s1821, 128
        $region96: #{transformer_layer.3} parent=91 // pred_fallthru
          _
      $region92: #{transformer_layer.3} parent=5 // pred_fallthru
        _
    $region6: #{transformer_layer.3} parent=1 // loop_footer
      %s27 = sadd.s32 1, %s23
    $region7: #{transformer_layer.3} parent=1 // loop_footer_branch
      %22 = sbr.rel target = $region3
    $region8: #{transformer_layer.3} parent=1 // loop_exit
      _
    %1826 = vsyncpa [#allocation6], 1
    %s1827 = scalar_lea.sflag [#allocation6], 1
    %1828 = vsyncpa %s1827, 1

</llo_original>
